<compile_context>
chip_gen: v7x
topology: tpu7x:2x2x1
jax: 0.10.0
libtpu: 0.0.40
codegen_flags: <defaults>
</compile_context>

<pallas_src>
import jax
import jax.numpy as jnp
import numpy as np
from jax.experimental import pallas as pl
from jax.experimental.pallas import tpu as pltpu

LANE = 128  # TPU lane width: all feature dims are zero-padded to this.


def _round_up(x, m):
    return (x + m - 1) // m * m


# --------------------------------------------------------------------------
# Fused forward kernel.
# grid = (num_gin_layers, node_row_tiles, node_col_tiles)   -- all sequential.
# --------------------------------------------------------------------------
def gnn_fused_kernel(adj_ref,            # (tm, tk)      adjacency tile (auto double-buffered)
                     gp_ref,             # (G, tm)       graph-pool tile
                     x_ref,              # (Np, F)       padded input features (VMEM resident)
                     oe_ref,             # (L-1, 1, F)   (1 + eps[l]) broadcast per layer
                     w1_ref, c1_ref,     # (L-1, F, F), (L-1, 1, F)   MLP layer 1 (BN/bias folded)
                     w2_ref, c2_ref,     # (L-1, F, F), (L-1, 1, F)   MLP layer 2 (BN/bias folded)
                     wp_ref, bp_ref,     # (L, F, F),   (1, F)        prediction linears (+summed bias)
                     score_ref,          # (G, F)        output
                     h_ref,              # scratch (2, Np, F)  ping-pong hidden state
                     acc_ref,            # scratch (tm, F)     Adj@h row-tile accumulator
                     sacc_ref):          # scratch (G, F)      score accumulator
    l = pl.program_id(0)
    i = pl.program_id(1)
    k = pl.program_id(2)
    nl = pl.num_programs(0)
    ni = pl.num_programs(1)
    nk = pl.num_programs(2)
    tm, tk = adj_ref.shape
    off_k = pl.multiple_of(k * tk, tk)
    off_i = pl.multiple_of(i * tm, tm)

    prev = l % 2          # slot holding hidden_rep[l]   (slot 0 is seeded with x)
    cur = 1 - prev        # slot receiving hidden_rep[l+1]

    # One-time init of the score accumulator.
    @pl.when((l == 0) & (i == 0) & (k == 0))
    def _():
        sacc_ref[...] = jnp.zeros_like(sacc_ref)

    # Stream the padded input features into ping-pong slot 0 (once, tile by tile).
    @pl.when((l == 0) & (i == 0))
    def _():
        h_ref[0, pl.ds(off_k, tk), :] = x_ref[pl.ds(off_k, tk), :]

    # k-reduction:  acc += Adj[i, k] @ h_prev[k]
    @pl.when(k == 0)
    def _():
        acc_ref[...] = jnp.zeros_like(acc_ref)

    h_k = h_ref[prev, pl.ds(off_k, tk), :]
    acc_ref[...] += jnp.dot(adj_ref[...], h_k, preferred_element_type=jnp.float32)

    # Finalize this row tile: eps term, GIN MLP (+folded BN) + ReLU, store new h,
    # and accumulate this tile's readout contribution.
    @pl.when(k == nk - 1)
    def _():
        h_row = h_ref[prev, pl.ds(off_i, tm), :]
        pooled = acc_ref[...] + oe_ref[l] * h_row
        a1 = jnp.maximum(
            jnp.dot(pooled, w1_ref[l], preferred_element_type=jnp.float32) + c1_ref[l], 0.0)
        h_new = jnp.maximum(
            jnp.dot(a1, w2_ref[l], preferred_element_type=jnp.float32) + c2_ref[l], 0.0)
        h_ref[cur, pl.ds(off_i, tm), :] = h_new

        gp = gp_ref[...]  # (G, tm)

        # hidden_rep[0] (raw features) readout, done once, during the first GIN layer.
        @pl.when(l == 0)
        def _():
            p0 = jnp.dot(gp, h_row, preferred_element_type=jnp.float32)
            sacc_ref[...] += jnp.dot(p0, wp_ref[0], preferred_element_type=jnp.float32)

        p = jnp.dot(gp, h_new, preferred_element_type=jnp.float32)
        sacc_ref[...] += jnp.dot(p, wp_ref[l + 1], preferred_element_type=jnp.float32)

    # Final write (all prediction biases were pre-summed into bp).
    @pl.when((l == nl - 1) & (i == ni - 1) & (k == nk - 1))
    def _():
        score_ref[...] = sacc_ref[...] + bp_ref[...]


# --------------------------------------------------------------------------
# Wrapper: one pallas_call for the entire forward.
# --------------------------------------------------------------------------
def gnn_l_forward(x_pad, adj_pad, gp_pad, kp, *, tm=128, tk=128):
    n_pad, feat = x_pad.shape
    G = gp_pad.shape[0]
    L = kp["num_layers"]
    assert n_pad % tm == 0 and n_pad % tk == 0
    grid = (L - 1, n_pad // tm, n_pad // tk)

    return pl.pallas_call(
        gnn_fused_kernel,
        out_shape=jax.ShapeDtypeStruct((G, feat), jnp.float32),
        grid_spec=pltpu.PrefetchScalarGridSpec(
            num_scalar_prefetch=0,
            grid=grid,
            in_specs=[
                pl.BlockSpec((tm, tk), lambda l, i, k: (i, k)),                 # adj tile
                pl.BlockSpec((G, tm), lambda l, i, k: (0, i)),                  # graph_pool tile
                pl.BlockSpec((n_pad, feat), lambda l, i, k: (0, 0)),            # x (resident)
                pl.BlockSpec((L - 1, 1, feat), lambda l, i, k: (0, 0, 0)),      # 1 + eps
                pl.BlockSpec((L - 1, feat, feat), lambda l, i, k: (0, 0, 0)),   # W1 (folded)
                pl.BlockSpec((L - 1, 1, feat), lambda l, i, k: (0, 0, 0)),      # c1 (folded)
                pl.BlockSpec((L - 1, feat, feat), lambda l, i, k: (0, 0, 0)),   # W2 (folded)
                pl.BlockSpec((L - 1, 1, feat), lambda l, i, k: (0, 0, 0)),      # c2 (folded)
                pl.BlockSpec((L, feat, feat), lambda l, i, k: (0, 0, 0)),       # W_pred stack
                pl.BlockSpec((1, feat), lambda l, i, k: (0, 0)),                # sum of pred biases
            ],
            out_specs=pl.BlockSpec((G, feat), lambda l, i, k: (0, 0)),
            scratch_shapes=[
                pltpu.VMEM((2, n_pad, feat), jnp.float32),   # h ping-pong
                pltpu.VMEM((tm, feat), jnp.float32),         # Adj@h accumulator
                pltpu.VMEM((G, feat), jnp.float32),          # score accumulator
            ],
        ),
        compiler_params=pltpu.CompilerParams(
            # Layer axis is a strict sequential dependency; row/k axes write shared VMEM
            # scratch -> all "arbitrary".  (Raise vmem_limit_bytes for large graphs.)
            dimension_semantics=("arbitrary", "arbitrary", "arbitrary")),
    )(adj_pad, gp_pad, x_pad,
      kp["oe"], kp["w1"], kp["c1"], kp["w2"], kp["c2"], kp["wp"], kp["bp"])


# --------------------------------------------------------------------------
# Parameters: deterministic init matching the module shapes, BN folded, padded + stacked.
# --------------------------------------------------------------------------
def fold_bn(gamma, beta, mean, var, bn_eps=1e-5):
    s = gamma / jnp.sqrt(var + bn_eps)
    t = beta - mean * s
    return s, t


def make_params(key, num_layers, num_mlp_layers, input_dim, hidden_dim, output_dim):
    assert num_mlp_layers == 2, "kernel fuses exactly a 2-layer MLP"
    assert num_layers >= 2
    feat = _round_up(max(input_dim, hidden_dim, output_dim), LANE)
    L = num_layers
    eps_param = jnp.zeros((L - 1,), jnp.float32)   # torch.zeros init

    w1_l, c1_l, w2_l, c2_l = [], [], [], []        # folded, UNPADDED (reference)
    for layer in range(L - 1):
        d_in = input_dim if layer == 0 else hidden_dim
        key, k1, k2 = jax.random.split(key, 3)
        w1 = jax.random.normal(k1, (d_in, hidden_dim), jnp.float32) * 0.1
        b1 = jnp.full((hidden_dim,), 0.01, jnp.float32)
        w2 = jax.random.normal(k2, (hidden_dim, hidden_dim), jnp.float32) * 0.1
        b2 = jnp.full((hidden_dim,), 0.01, jnp.float32)
        ones = jnp.ones((hidden_dim,), jnp.float32)
        zeros = jnp.zeros((hidden_dim,), jnp.float32)
        s1, t1 = fold_bn(ones, zeros, zeros, ones)   # MLP-internal BN (eval running stats)
        s2, t2 = fold_bn(ones, zeros, zeros, ones)   # GNN_L outer BN   (eval running stats)
        # relu((x @ W + b) * s + t) == relu(x @ (W*s) + (b*s + t))
        w1_l.append(w1 * s1[None, :]); c1_l.append(b1 * s1 + t1)
        w2_l.append(w2 * s2[None, :]); c2_l.append(b2 * s2 + t2)

    wp_l, bp_l = [], []
    for layer in range(L):
        d_in = input_dim if layer == 0 else hidden_dim
        key, k1 = jax.random.split(key)
        wp_l.append(jax.random.normal(k1, (d_in, output_dim), jnp.float32) * 0.1)
        bp_l.append(jnp.full((output_dim,), 0.02, jnp.float32))

    def pad2(a, r, c):
        return jnp.zeros((r, c), jnp.float32).at[:a.shape[0], :a.shape[1]].set(a)

    kern = {
        "num_layers": L, "feat": feat,
        "oe": (1.0 + eps_param)[:, None, None] * jnp.ones((L - 1, 1, feat), jnp.float32),
        "w1": jnp.stack([pad2(w, feat, feat) for w in w1_l]),
        "c1": jnp.stack([pad2(c[None, :], 1, feat) for c in c1_l]),
        "w2": jnp.stack([pad2(w, feat, feat) for w in w2_l]),
        "c2": jnp.stack([pad2(c[None, :], 1, feat) for c in c2_l]),
        "wp": jnp.stack([pad2(w, feat, feat) for w in wp_l]),
        "bp": pad2(sum(bp_l)[None, :], 1, feat),
    }
    ref = {"eps": eps_param, "w1": w1_l, "c1": c1_l, "w2": w2_l, "c2": c2_l,
           "wp": wp_l, "bp": bp_l}
    return kern, ref


# --------------------------------------------------------------------------
# Pure-JAX reference (same folded math, unpadded) for correctness checking.
# --------------------------------------------------------------------------
def gnn_l_reference(x, adj, gp, ref, num_layers):
    hidden_rep = [x]
    h = x
    for layer in range(num_layers - 1):
        pooled = adj @ h + (1.0 + ref["eps"][layer]) * h
        a1 = jnp.maximum(pooled @ ref["w1"][layer] + ref["c1"][layer], 0.0)
        h = jnp.maximum(a1 @ ref["w2"][layer] + ref["c2"][layer], 0.0)
        hidden_rep.append(h)
    score = 0.0
    for layer, hr in enumerate(hidden_rep):
        score = score + (gp @ hr) @ ref["wp"][layer] + ref["bp"][layer]
    return score


# --------------------------------------------------------------------------
# Synthetic batch-graph construction (dense Adj_block / graph_pool, zero-padded).
# --------------------------------------------------------------------------
def make_batch(key, graph_sizes, input_dim, feat, n_pad):
    n = sum(graph_sizes)
    g = len(graph_sizes)
    x = jax.random.normal(key, (n, input_dim), jnp.float32)

    adj = np.zeros((n, n), np.float32)
    rng = np.random.default_rng(0)
    start = 0
    for sz in graph_sizes:
        blk = (rng.random((sz, sz)) < 0.3).astype(np.float32)
        blk = np.triu(blk, 1)
        blk = blk + blk.T                  # undirected, no self loops (learn_eps=True)
        adj[start:start + sz, start:start + sz] = blk
        start += sz

    gp = np.zeros((g, n), np.float32)
    start = 0
    for i, sz in enumerate(graph_sizes):
        gp[i, start:start + sz] = 1.0      # 'sum' graph pooling
        start += sz

    adj = jnp.asarray(adj)
    gp = jnp.asarray(gp)
    # Zero-padded versions for the kernel (padded rows/cols never leak into real outputs).
    x_pad = jnp.zeros((n_pad, feat), jnp.float32).at[:n, :input_dim].set(x)
    adj_pad = jnp.zeros((n_pad, n_pad), jnp.float32).at[:n, :n].set(adj)
    gp_pad = jnp.zeros((g, n_pad), jnp.float32).at[:, :n].set(gp)
    return x, adj, gp, x_pad, adj_pad, gp_pad


if __name__ == "__main__":
    num_layers = 3        # -> 2 GIN layers + 3 prediction linears
    num_mlp_layers = 2
    input_dim = 16
    hidden_dim = 32
    output_dim = 8
    graph_sizes = [70, 80]   # 150 nodes, 2 graphs -> padded to 256 (2x2 node tiles)
    tm = tk = 128            # node row / reduction tile sizes

    key = jax.random.PRNGKey(0)
    key, kparam_key, kdata_key = jax.random.split(key, 3)
    kparams, refparams = make_params(kparam_key, num_layers, num_mlp_layers,
                                     input_dim, hidden_dim, output_dim)
    feat = kparams["feat"]
    n_pad = _round_up(sum(graph_sizes), int(np.lcm(tm, tk)))
    x, adj, gp, x_pad, adj_pad, gp_pad = make_batch(kdata_key, graph_sizes,
                                                    input_dim, feat, n_pad)

    out_pad = gnn_l_forward(x_pad, adj_pad, gp_pad, kparams, tm=tm, tk=tk)
    out_pad = jax.block_until_ready(out_pad)
    out = np.asarray(out_pad)[:, :output_dim]

    ref = np.asarray(gnn_l_reference(x, adj, gp, refparams, num_layers))
    np.testing.assert_allclose(out, ref, rtol=1e-4, atol=1e-4)

    print("KERNEL_OK")
</pallas_src>

<mosaic_0001>
module attributes {stable_mosaic.version = 11 : i64} {
  func.func @gnn_fused_kernel(%arg0: i32, %arg1: i32, %arg2: i32, %arg3: memref<128x128xf32, #tpu.memory_space<vmem>>, %arg4: memref<2x128xf32, #tpu.memory_space<vmem>>, %arg5: memref<256x128xf32, #tpu.memory_space<vmem>>, %arg6: memref<2x1x128xf32, #tpu.memory_space<vmem>>, %arg7: memref<2x128x128xf32, #tpu.memory_space<vmem>>, %arg8: memref<2x1x128xf32, #tpu.memory_space<vmem>>, %arg9: memref<2x128x128xf32, #tpu.memory_space<vmem>>, %arg10: memref<2x1x128xf32, #tpu.memory_space<vmem>>, %arg11: memref<3x128x128xf32, #tpu.memory_space<vmem>>, %arg12: memref<1x128xf32, #tpu.memory_space<vmem>>, %arg13: memref<2x128xf32, #tpu.memory_space<vmem>>, %arg14: memref<2x256x128xf32, #tpu.memory_space<vmem>>, %arg15: memref<128x128xf32, #tpu.memory_space<vmem>>, %arg16: memref<2x128xf32, #tpu.memory_space<vmem>>) attributes {dimension_semantics = [#tpu.dimension_semantics<arbitrary>, #tpu.dimension_semantics<arbitrary>, #tpu.dimension_semantics<arbitrary>], iteration_bounds = array<i64: 2, 2, 2>, scalar_prefetch = 0 : i64, scratch_operands = 3 : i64, tpu.core_type = #tpu.core_type<tc>, window_params = [{transform_indices = @transform_0, window_bounds = array<i64: 128, 128>}, {transform_indices = @transform_1, window_bounds = array<i64: 2, 128>}, {pipeline_mode = #tpu.pipeline_mode<synchronous>, transform_indices = @transform_2, window_bounds = array<i64: 256, 128>}, {pipeline_mode = #tpu.pipeline_mode<synchronous>, transform_indices = @transform_3, window_bounds = array<i64: 2, 1, 128>}, {pipeline_mode = #tpu.pipeline_mode<synchronous>, transform_indices = @transform_4, window_bounds = array<i64: 2, 128, 128>}, {pipeline_mode = #tpu.pipeline_mode<synchronous>, transform_indices = @transform_5, window_bounds = array<i64: 2, 1, 128>}, {pipeline_mode = #tpu.pipeline_mode<synchronous>, transform_indices = @transform_6, window_bounds = array<i64: 2, 128, 128>}, {pipeline_mode = #tpu.pipeline_mode<synchronous>, transform_indices = @transform_7, window_bounds = array<i64: 2, 1, 128>}, {pipeline_mode = #tpu.pipeline_mode<synchronous>, transform_indices = @transform_8, window_bounds = array<i64: 3, 128, 128>}, {pipeline_mode = #tpu.pipeline_mode<synchronous>, transform_indices = @transform_9, window_bounds = array<i64: 1, 128>}, {pipeline_mode = #tpu.pipeline_mode<synchronous>, transform_indices = @transform_10, window_bounds = array<i64: 2, 128>}]} {
    %c128_i32 = arith.constant 128 : i32
    %0 = arith.muli %arg2, %c128_i32 : i32
    %1 = tpu.assume_multiple %0, 128 : i32
    %c128_i32_0 = arith.constant 128 : i32
    %2 = arith.muli %arg1, %c128_i32_0 : i32
    %3 = tpu.assume_multiple %2, 128 : i32
    %c2_i32 = arith.constant 2 : i32
    %c0_i32 = arith.constant 0 : i32
    %4 = arith.cmpi eq, %c2_i32, %c0_i32 : i32
    %c1_i32 = arith.constant 1 : i32
    %5 = arith.select %4, %c1_i32, %c2_i32 : i32
    %6 = arith.remsi %arg0, %5 : i32
    %c0_i32_1 = arith.constant 0 : i32
    %7 = arith.cmpi ne, %6, %c0_i32_1 : i32
    %c0_i32_2 = arith.constant 0 : i32
    %8 = arith.cmpi slt, %6, %c0_i32_2 : i32
    %c0_i32_3 = arith.constant 0 : i32
    %9 = arith.cmpi slt, %5, %c0_i32_3 : i32
    %10 = arith.xori %8, %9 : i1
    %11 = arith.andi %10, %7 : i1
    %12 = arith.addi %6, %5 : i32
    %13 = arith.select %11, %12, %6 : i32
    %c1_i32_4 = arith.constant 1 : i32
    %14 = arith.subi %c1_i32_4, %13 : i32
    %c0_i32_5 = arith.constant 0 : i32
    %15 = arith.cmpi eq, %arg0, %c0_i32_5 : i32
    %c0_i32_6 = arith.constant 0 : i32
    %16 = arith.cmpi eq, %arg1, %c0_i32_6 : i32
    %17 = arith.andi %15, %16 : i1
    %c0_i32_7 = arith.constant 0 : i32
    %18 = arith.cmpi eq, %arg2, %c0_i32_7 : i32
    %19 = arith.andi %17, %18 : i1
    %20 = arith.extui %19 : i1 to i32
    %c0_i32_8 = arith.constant 0 : i32
    %21 = arith.cmpi ne, %20, %c0_i32_8 : i32
    scf.if %21 {
      %cst_26 = arith.constant 0.000000e+00 : f32
      %49 = vector.broadcast %cst_26 : f32 to vector<2x128xf32>
      %c0_27 = arith.constant 0 : index
      %c0_28 = arith.constant 0 : index
      %50 = vector.load %arg16[%c0_27, %c0_28] : memref<2x128xf32, #tpu.memory_space<vmem>>, vector<2x128xf32>
      tpu.vector_store %arg16[%c0_27, %c0_28], %49 {strides = array<i32>} : memref<2x128xf32, #tpu.memory_space<vmem>>, vector<2x128xf32>,
    } else {
    }
    %c0_i32_9 = arith.constant 0 : i32
    %22 = arith.cmpi eq, %arg0, %c0_i32_9 : i32
    %c0_i32_10 = arith.constant 0 : i32
    %23 = arith.cmpi eq, %arg1, %c0_i32_10 : i32
    %24 = arith.andi %22, %23 : i1
    %25 = arith.extui %24 : i1 to i32
    %c0_i32_11 = arith.constant 0 : i32
    %26 = arith.cmpi ne, %25, %c0_i32_11 : i32
    scf.if %26 {
      %49 = arith.index_cast %1 : i32 to index
      %c0_26 = arith.constant 0 : index
      %50 = vector.load %arg5[%49, %c0_26] : memref<256x128xf32, #tpu.memory_space<vmem>>, vector<128x128xf32>
      %c0_27 = arith.constant 0 : index
      %51 = arith.index_cast %1 : i32 to index
      %c0_28 = arith.constant 0 : index
      %52 = vector.load %arg14[%c0_27, %51, %c0_28] : memref<2x256x128xf32, #tpu.memory_space<vmem>>, vector<1x128x128xf32>
      %53 = vector.shape_cast %52 : vector<1x128x128xf32> to vector<128x128xf32>
      %54 = vector.shape_cast %50 : vector<128x128xf32> to vector<1x128x128xf32>
      tpu.vector_store %arg14[%c0_27, %51, %c0_28], %54 {strides = array<i32>} : memref<2x256x128xf32, #tpu.memory_space<vmem>>, vector<1x128x128xf32>,
    } else {
    }
    %c0_i32_12 = arith.constant 0 : i32
    %27 = arith.cmpi eq, %arg2, %c0_i32_12 : i32
    %28 = arith.extui %27 : i1 to i32
    %c0_i32_13 = arith.constant 0 : i32
    %29 = arith.cmpi ne, %28, %c0_i32_13 : i32
    scf.if %29 {
      %cst_26 = arith.constant 0.000000e+00 : f32
      %49 = vector.broadcast %cst_26 : f32 to vector<128x128xf32>
      %c0_27 = arith.constant 0 : index
      %c0_28 = arith.constant 0 : index
      %50 = vector.load %arg15[%c0_27, %c0_28] : memref<128x128xf32, #tpu.memory_space<vmem>>, vector<128x128xf32>
      tpu.vector_store %arg15[%c0_27, %c0_28], %49 {strides = array<i32>} : memref<128x128xf32, #tpu.memory_space<vmem>>, vector<128x128xf32>,
    } else {
    }
    %30 = arith.index_cast %13 : i32 to index
    %31 = arith.index_cast %1 : i32 to index
    %c0 = arith.constant 0 : index
    %32 = vector.load %arg14[%30, %31, %c0] : memref<2x256x128xf32, #tpu.memory_space<vmem>>, vector<1x128x128xf32>
    %33 = vector.shape_cast %32 : vector<1x128x128xf32> to vector<128x128xf32>
    %c0_14 = arith.constant 0 : index
    %c0_15 = arith.constant 0 : index
    %34 = vector.load %arg15[%c0_14, %c0_15] : memref<128x128xf32, #tpu.memory_space<vmem>>, vector<128x128xf32>
    %c0_16 = arith.constant 0 : index
    %c0_17 = arith.constant 0 : index
    %35 = vector.load %arg3[%c0_16, %c0_17] : memref<128x128xf32, #tpu.memory_space<vmem>>, vector<128x128xf32>
    %cst = arith.constant dense<0.000000e+00> : vector<128x128xf32>
    %36 = tpu.matmul %35, %33, %cst {dimension_numbers = #tpu.dot_dimension_numbers<[1], [0], [0], [1], [0, 0, 1, 1], [], []>} : vector<128x128xf32>, vector<128x128xf32>, vector<128x128xf32> -> vector<128x128xf32>
    %37 = arith.addf %34, %36 : vector<128x128xf32>
    %c0_18 = arith.constant 0 : index
    %c0_19 = arith.constant 0 : index
    %38 = vector.load %arg15[%c0_18, %c0_19] : memref<128x128xf32, #tpu.memory_space<vmem>>, vector<128x128xf32>
    tpu.vector_store %arg15[%c0_18, %c0_19], %37 {strides = array<i32>} : memref<128x128xf32, #tpu.memory_space<vmem>>, vector<128x128xf32>,
    %c1_i32_20 = arith.constant 1 : i32
    %39 = arith.cmpi eq, %arg2, %c1_i32_20 : i32
    %40 = arith.extui %39 : i1 to i32
    %c0_i32_21 = arith.constant 0 : i32
    %41 = arith.cmpi ne, %40, %c0_i32_21 : i32
    scf.if %41 {
      %49 = arith.index_cast %13 : i32 to index
      %50 = arith.index_cast %3 : i32 to index
      %c0_26 = arith.constant 0 : index
      %51 = vector.load %arg14[%49, %50, %c0_26] : memref<2x256x128xf32, #tpu.memory_space<vmem>>, vector<1x128x128xf32>
      %52 = vector.shape_cast %51 : vector<1x128x128xf32> to vector<128x128xf32>
      %c0_27 = arith.constant 0 : index
      %c0_28 = arith.constant 0 : index
      %53 = vector.load %arg15[%c0_27, %c0_28] : memref<128x128xf32, #tpu.memory_space<vmem>>, vector<128x128xf32>
      %54 = arith.index_cast %arg0 : i32 to index
      %c0_29 = arith.constant 0 : index
      %c0_30 = arith.constant 0 : index
      %55 = vector.load %arg6[%54, %c0_29, %c0_30] : memref<2x1x128xf32, #tpu.memory_space<vmem>>, vector<1x1x128xf32>
      %56 = vector.shape_cast %55 : vector<1x1x128xf32> to vector<1x128xf32>
      %57 = vector.broadcast %56 : vector<1x128xf32> to vector<128x128xf32>
      %58 = arith.mulf %57, %52 : vector<128x128xf32>
      %59 = arith.addf %53, %58 : vector<128x128xf32>
      %60 = arith.index_cast %arg0 : i32 to index
      %c0_31 = arith.constant 0 : index
      %c0_32 = arith.constant 0 : index
      %61 = vector.load %arg7[%60, %c0_31, %c0_32] : memref<2x128x128xf32, #tpu.memory_space<vmem>>, vector<1x128x128xf32>
      %62 = vector.shape_cast %61 : vector<1x128x128xf32> to vector<128x128xf32>
      %cst_33 = arith.constant dense<0.000000e+00> : vector<128x128xf32>
      %63 = tpu.matmul %59, %62, %cst_33 {dimension_numbers = #tpu.dot_dimension_numbers<[1], [0], [0], [1], [0, 0, 1, 1], [], []>} : vector<128x128xf32>, vector<128x128xf32>, vector<128x128xf32> -> vector<128x128xf32>
      %64 = arith.index_cast %arg0 : i32 to index
      %c0_34 = arith.constant 0 : index
      %c0_35 = arith.constant 0 : index
      %65 = vector.load %arg8[%64, %c0_34, %c0_35] : memref<2x1x128xf32, #tpu.memory_space<vmem>>, vector<1x1x128xf32>
      %66 = vector.shape_cast %65 : vector<1x1x128xf32> to vector<1x128xf32>
      %67 = vector.broadcast %66 : vector<1x128xf32> to vector<128x128xf32>
      %68 = arith.addf %63, %67 : vector<128x128xf32>
      %cst_36 = arith.constant 0.000000e+00 : f32
      %69 = vector.broadcast %cst_36 : f32 to vector<128x128xf32>
      %70 = arith.maximumf %68, %69 : vector<128x128xf32>
      %71 = arith.index_cast %arg0 : i32 to index
      %c0_37 = arith.constant 0 : index
      %c0_38 = arith.constant 0 : index
      %72 = vector.load %arg9[%71, %c0_37, %c0_38] : memref<2x128x128xf32, #tpu.memory_space<vmem>>, vector<1x128x128xf32>
      %73 = vector.shape_cast %72 : vector<1x128x128xf32> to vector<128x128xf32>
      %cst_39 = arith.constant dense<0.000000e+00> : vector<128x128xf32>
      %74 = tpu.matmul %70, %73, %cst_39 {dimension_numbers = #tpu.dot_dimension_numbers<[1], [0], [0], [1], [0, 0, 1, 1], [], []>} : vector<128x128xf32>, vector<128x128xf32>, vector<128x128xf32> -> vector<128x128xf32>
      %75 = arith.index_cast %arg0 : i32 to index
      %c0_40 = arith.constant 0 : index
      %c0_41 = arith.constant 0 : index
      %76 = vector.load %arg10[%75, %c0_40, %c0_41] : memref<2x1x128xf32, #tpu.memory_space<vmem>>, vector<1x1x128xf32>
      %77 = vector.shape_cast %76 : vector<1x1x128xf32> to vector<1x128xf32>
      %78 = vector.broadcast %77 : vector<1x128xf32> to vector<128x128xf32>
      %79 = arith.addf %74, %78 : vector<128x128xf32>
      %cst_42 = arith.constant 0.000000e+00 : f32
      %80 = vector.broadcast %cst_42 : f32 to vector<128x128xf32>
      %81 = arith.maximumf %79, %80 : vector<128x128xf32>
      %82 = arith.index_cast %14 : i32 to index
      %83 = arith.index_cast %3 : i32 to index
      %c0_43 = arith.constant 0 : index
      %84 = vector.load %arg14[%82, %83, %c0_43] : memref<2x256x128xf32, #tpu.memory_space<vmem>>, vector<1x128x128xf32>
      %85 = vector.shape_cast %84 : vector<1x128x128xf32> to vector<128x128xf32>
      %86 = vector.shape_cast %81 : vector<128x128xf32> to vector<1x128x128xf32>
      tpu.vector_store %arg14[%82, %83, %c0_43], %86 {strides = array<i32>} : memref<2x256x128xf32, #tpu.memory_space<vmem>>, vector<1x128x128xf32>,
      %c0_44 = arith.constant 0 : index
      %c0_45 = arith.constant 0 : index
      %87 = vector.load %arg4[%c0_44, %c0_45] : memref<2x128xf32, #tpu.memory_space<vmem>>, vector<2x128xf32>
      %c0_i32_46 = arith.constant 0 : i32
      %88 = arith.cmpi eq, %arg0, %c0_i32_46 : i32
      %89 = arith.extui %88 : i1 to i32
      %c0_i32_47 = arith.constant 0 : i32
      %90 = arith.cmpi ne, %89, %c0_i32_47 : i32
      scf.if %90 {
        %cst_57 = arith.constant dense<0.000000e+00> : vector<2x128xf32>
        %100 = tpu.matmul %87, %52, %cst_57 {dimension_numbers = #tpu.dot_dimension_numbers<[1], [0], [0], [1], [0, 0, 1, 1], [], []>} : vector<2x128xf32>, vector<128x128xf32>, vector<2x128xf32> -> vector<2x128xf32>
        %c0_58 = arith.constant 0 : index
        %c0_59 = arith.constant 0 : index
        %101 = vector.load %arg16[%c0_58, %c0_59] : memref<2x128xf32, #tpu.memory_space<vmem>>, vector<2x128xf32>
        %c0_60 = arith.constant 0 : index
        %c0_61 = arith.constant 0 : index
        %c0_62 = arith.constant 0 : index
        %102 = vector.load %arg11[%c0_60, %c0_61, %c0_62] : memref<3x128x128xf32, #tpu.memory_space<vmem>>, vector<1x128x128xf32>
        %103 = vector.shape_cast %102 : vector<1x128x128xf32> to vector<128x128xf32>
        %cst_63 = arith.constant dense<0.000000e+00> : vector<2x128xf32>
        %104 = tpu.matmul %100, %103, %cst_63 {dimension_numbers = #tpu.dot_dimension_numbers<[1], [0], [0], [1], [0, 0, 1, 1], [], []>} : vector<2x128xf32>, vector<128x128xf32>, vector<2x128xf32> -> vector<2x128xf32>
        %105 = arith.addf %101, %104 : vector<2x128xf32>
        %c0_64 = arith.constant 0 : index
        %c0_65 = arith.constant 0 : index
        %106 = vector.load %arg16[%c0_64, %c0_65] : memref<2x128xf32, #tpu.memory_space<vmem>>, vector<2x128xf32>
        tpu.vector_store %arg16[%c0_64, %c0_65], %105 {strides = array<i32>} : memref<2x128xf32, #tpu.memory_space<vmem>>, vector<2x128xf32>,
      } else {
      }
      %cst_48 = arith.constant dense<0.000000e+00> : vector<2x128xf32>
      %91 = tpu.matmul %87, %81, %cst_48 {dimension_numbers = #tpu.dot_dimension_numbers<[1], [0], [0], [1], [0, 0, 1, 1], [], []>} : vector<2x128xf32>, vector<128x128xf32>, vector<2x128xf32> -> vector<2x128xf32>
      %c0_49 = arith.constant 0 : index
      %c0_50 = arith.constant 0 : index
      %92 = vector.load %arg16[%c0_49, %c0_50] : memref<2x128xf32, #tpu.memory_space<vmem>>, vector<2x128xf32>
      %c1_i32_51 = arith.constant 1 : i32
      %93 = arith.addi %arg0, %c1_i32_51 : i32
      %94 = arith.index_cast %93 : i32 to index
      %c0_52 = arith.constant 0 : index
      %c0_53 = arith.constant 0 : index
      %95 = vector.load %arg11[%94, %c0_52, %c0_53] : memref<3x128x128xf32, #tpu.memory_space<vmem>>, vector<1x128x128xf32>
      %96 = vector.shape_cast %95 : vector<1x128x128xf32> to vector<128x128xf32>
      %cst_54 = arith.constant dense<0.000000e+00> : vector<2x128xf32>
      %97 = tpu.matmul %91, %96, %cst_54 {dimension_numbers = #tpu.dot_dimension_numbers<[1], [0], [0], [1], [0, 0, 1, 1], [], []>} : vector<2x128xf32>, vector<128x128xf32>, vector<2x128xf32> -> vector<2x128xf32>
      %98 = arith.addf %92, %97 : vector<2x128xf32>
      %c0_55 = arith.constant 0 : index
      %c0_56 = arith.constant 0 : index
      %99 = vector.load %arg16[%c0_55, %c0_56] : memref<2x128xf32, #tpu.memory_space<vmem>>, vector<2x128xf32>
      tpu.vector_store %arg16[%c0_55, %c0_56], %98 {strides = array<i32>} : memref<2x128xf32, #tpu.memory_space<vmem>>, vector<2x128xf32>,
    } else {
    }
    %c1_i32_22 = arith.constant 1 : i32
    %42 = arith.cmpi eq, %arg0, %c1_i32_22 : i32
    %c1_i32_23 = arith.constant 1 : i32
    %43 = arith.cmpi eq, %arg1, %c1_i32_23 : i32
    %44 = arith.andi %42, %43 : i1
    %c1_i32_24 = arith.constant 1 : i32
    %45 = arith.cmpi eq, %arg2, %c1_i32_24 : i32
    %46 = arith.andi %44, %45 : i1
    %47 = arith.extui %46 : i1 to i32
    %c0_i32_25 = arith.constant 0 : i32
    %48 = arith.cmpi ne, %47, %c0_i32_25 : i32
    scf.if %48 {
      %c0_26 = arith.constant 0 : index
      %c0_27 = arith.constant 0 : index
      %49 = vector.load %arg16[%c0_26, %c0_27] : memref<2x128xf32, #tpu.memory_space<vmem>>, vector<2x128xf32>
      %c0_28 = arith.constant 0 : index
      %c0_29 = arith.constant 0 : index
      %50 = vector.load %arg12[%c0_28, %c0_29] : memref<1x128xf32, #tpu.memory_space<vmem>>, vector<1x128xf32>
      %51 = vector.broadcast %50 : vector<1x128xf32> to vector<2x128xf32>
      %52 = arith.addf %49, %51 : vector<2x128xf32>
      %c0_30 = arith.constant 0 : index
      %c0_31 = arith.constant 0 : index
      %53 = vector.load %arg13[%c0_30, %c0_31] : memref<2x128xf32, #tpu.memory_space<vmem>>, vector<2x128xf32>
      tpu.vector_store %arg13[%c0_30, %c0_31], %52 {strides = array<i32>} : memref<2x128xf32, #tpu.memory_space<vmem>>, vector<2x128xf32>,
    } else {
    }
    return
  }
  func.func @transform_0(%arg0: i32, %arg1: i32, %arg2: i32) -> (i32, i32) {
    %c0_i32 = arith.constant 0 : i32
    return %arg1, %arg2 : i32, i32
  }
  func.func @transform_1(%arg0: i32, %arg1: i32, %arg2: i32) -> (i32, i32) {
    %c0_i32 = arith.constant 0 : i32
    %c0_i32_0 = arith.constant 0 : i32
    return %c0_i32, %arg1 : i32, i32
  }
  func.func @transform_2(%arg0: i32, %arg1: i32, %arg2: i32) -> (i32, i32) {
    %c0_i32 = arith.constant 0 : i32
    %c0_i32_0 = arith.constant 0 : i32
    %c0_i32_1 = arith.constant 0 : i32
    return %c0_i32, %c0_i32_0 : i32, i32
  }
  func.func @transform_3(%arg0: i32, %arg1: i32, %arg2: i32) -> (i32, i32, i32) {
    %c0_i32 = arith.constant 0 : i32
    %c0_i32_0 = arith.constant 0 : i32
    %c0_i32_1 = arith.constant 0 : i32
    %c0_i32_2 = arith.constant 0 : i32
    return %c0_i32, %c0_i32_0, %c0_i32_1 : i32, i32, i32
  }
  func.func @transform_4(%arg0: i32, %arg1: i32, %arg2: i32) -> (i32, i32, i32) {
    %c0_i32 = arith.constant 0 : i32
    %c0_i32_0 = arith.constant 0 : i32
    %c0_i32_1 = arith.constant 0 : i32
    %c0_i32_2 = arith.constant 0 : i32
    return %c0_i32, %c0_i32_0, %c0_i32_1 : i32, i32, i32
  }
  func.func @transform_5(%arg0: i32, %arg1: i32, %arg2: i32) -> (i32, i32, i32) {
    %c0_i32 = arith.constant 0 : i32
    %c0_i32_0 = arith.constant 0 : i32
    %c0_i32_1 = arith.constant 0 : i32
    %c0_i32_2 = arith.constant 0 : i32
    return %c0_i32, %c0_i32_0, %c0_i32_1 : i32, i32, i32
  }
  func.func @transform_6(%arg0: i32, %arg1: i32, %arg2: i32) -> (i32, i32, i32) {
    %c0_i32 = arith.constant 0 : i32
    %c0_i32_0 = arith.constant 0 : i32
    %c0_i32_1 = arith.constant 0 : i32
    %c0_i32_2 = arith.constant 0 : i32
    return %c0_i32, %c0_i32_0, %c0_i32_1 : i32, i32, i32
  }
  func.func @transform_7(%arg0: i32, %arg1: i32, %arg2: i32) -> (i32, i32, i32) {
    %c0_i32 = arith.constant 0 : i32
    %c0_i32_0 = arith.constant 0 : i32
    %c0_i32_1 = arith.constant 0 : i32
    %c0_i32_2 = arith.constant 0 : i32
    return %c0_i32, %c0_i32_0, %c0_i32_1 : i32, i32, i32
  }
  func.func @transform_8(%arg0: i32, %arg1: i32, %arg2: i32) -> (i32, i32, i32) {
    %c0_i32 = arith.constant 0 : i32
    %c0_i32_0 = arith.constant 0 : i32
    %c0_i32_1 = arith.constant 0 : i32
    %c0_i32_2 = arith.constant 0 : i32
    return %c0_i32, %c0_i32_0, %c0_i32_1 : i32, i32, i32
  }
  func.func @transform_9(%arg0: i32, %arg1: i32, %arg2: i32) -> (i32, i32) {
    %c0_i32 = arith.constant 0 : i32
    %c0_i32_0 = arith.constant 0 : i32
    %c0_i32_1 = arith.constant 0 : i32
    return %c0_i32, %c0_i32_0 : i32, i32
  }
  func.func @transform_10(%arg0: i32, %arg1: i32, %arg2: i32) -> (i32, i32) {
    %c0_i32 = arith.constant 0 : i32
    %c0_i32_0 = arith.constant 0 : i32
    %c0_i32_1 = arith.constant 0 : i32
    return %c0_i32, %c0_i32_0 : i32, i32
  }
}

</mosaic_0001>

<llo_original>
// kernel: tpu_custom_call.1
$region0: #{tpu_custom_call.1}
  #allocation0 [shape = 'u32[]', space=smem, size = 0x4, offset = 0x4, fixed_abs, tag = 'smem constant byte address 0x4 - core index']
  #allocation1 [shape = 'u32[144,128]{1,0:T(1,128)}', space=vmem, size = 0x12000, scoped, tag = 'internal scratch']
  #allocation2 [shape = 'f32[2,256,128]{2,1,0:T(8,128)}', space=vmem, size = 0x40000, scoped, tag = 'scratch operand']
  #allocation3 [shape = 'f32[128,128]{1,0:T(8,128)}', space=vmem, size = 0x10000, scoped, tag = 'scratch operand']
  #allocation4 [shape = 'f32[2,128]{1,0:T(2,128)}', space=vmem, size = 0x400, scoped, tag = 'scratch operand']
  %s0 = inlined_call_operand.hbm [shape: f32[256,256], index: 0, kind: input, shape index: {}]
  %s1 = inlined_call_operand.hbm [shape: f32[2,256], index: 1, kind: input, shape index: {}]
  %s2 = inlined_call_operand.hbm [shape: f32[256,128], index: 2, kind: input, shape index: {}]
  %s3 = inlined_call_operand.vmem [shape: f32[2,1,128], index: 3, kind: input, shape index: {}]
  %s4 = inlined_call_operand.hbm [shape: f32[2,128,128], index: 4, kind: input, shape index: {}]
  %s5 = inlined_call_operand.vmem [shape: f32[2,1,128], index: 5, kind: input, shape index: {}]
  %s6 = inlined_call_operand.hbm [shape: f32[2,128,128], index: 6, kind: input, shape index: {}]
  %s7 = inlined_call_operand.vmem [shape: f32[2,1,128], index: 7, kind: input, shape index: {}]
  %s8 = inlined_call_operand.hbm [shape: f32[3,128,128], index: 8, kind: input, shape index: {}]
  %s9 = inlined_call_operand.vmem [shape: f32[1,128], index: 9, kind: input, shape index: {}]
  %s10 = inlined_call_operand.hbm [shape: f32[2,128], index: 10, kind: output, shape index: {}]
  %s11 = sld [smem:[#allocation0]]
  $region121: #{tpu_custom_call.1} parent=0
    _
  %s13 = ssub.s32 1, %s11
  %s14 = scalar_select 0, %s13, %s11
  $region1: #{tpu_custom_call.1} parent=0
    #allocation5 [shape = 'u8[131072]{0}', space=vmem, size = 0x20000, scoped, tag = 'input window, operand 0']
    #allocation6 [shape = 's32[2]{0}', space=sflag, size = 0x8, scoped, tag = 'scoped memory for tpu_custom_call.1']
    #allocation7 [shape = 's32[2]{0}', space=sflag, size = 0x8, scoped, tag = 'scoped memory for tpu_custom_call.1']
    #allocation8 [shape = 'u8[2048]{0}', space=vmem, size = 0x800, scoped, tag = 'input window, operand 1']
    #allocation9 [shape = 's32[2]{0}', space=sflag, size = 0x8, scoped, tag = 'scoped memory for tpu_custom_call.1']
    #allocation10 [shape = 'u8[131072]{0}', space=vmem, size = 0x20000, scoped, tag = 'input window, operand 2, single buffered']
    #allocation11 [shape = 'u8[131072]{0}', space=vmem, size = 0x20000, scoped, tag = 'input window, operand 4, single buffered']
    #allocation12 [shape = 's32[1]{0}', space=sflag, size = 0x4, scoped, tag = 'scoped memory for tpu_custom_call.1']
    #allocation13 [shape = 'u8[131072]{0}', space=vmem, size = 0x20000, scoped, tag = 'input window, operand 6, single buffered']
    #allocation14 [shape = 'u8[196608]{0}', space=vmem, size = 0x30000, scoped, tag = 'input window, operand 8, single buffered']
    #allocation15 [shape = 's32[1]{0}', space=sflag, size = 0x4, scoped, tag = 'scoped memory for tpu_custom_call.1']
    #allocation16 [shape = 'u8[1024]{0}', space=vmem, size = 0x400, scoped, tag = 'output window, operand 0, single buffered']
    %15 = vsyncpa [#allocation6], 0
    %s16 = scalar_lea.sflag [#allocation6], 1
    %17 = vsyncpa %s16, 0
    %18 = vsyncpa [#allocation9], 0
    %s19 = scalar_lea.sflag [#allocation9], 1
    %20 = vsyncpa %s19, 0
    %21 = vsyncpa [#allocation12], 0
    %22 = vsyncpa [#allocation15], 0
    %23 = vsyncpa [#allocation7], 0
    loop: start=0, step=1, limit=10
    $region2: #{tpu_custom_call.1} parent=1 // loop_pre_header
      _
    $region3: #{tpu_custom_call.1} parent=1 // loop_header
      %s25 = sphi 0, %s29
      %p26 = scmp.ge.s32.totalorder %s25, 10
      %s32 = sphi 0, %s51
      %s33 = sphi 0, %s47
      %s34 = sphi 0, %s43
      %s35 = sphi 0, %s32
      %s36 = sphi 0, %s33
      %s37 = sphi 0, %s34
      %s38 = sphi 0, %s35
      %s39 = sphi 0, %s36
      %s40 = sphi 0, %s37
      %s56 = sphi 0, %s58
      %s59 = sphi 0, %s56
      %s60 = sphi 0, %s59
      %s76 = sphi 0, %s60
      %s82 = sphi 0, %s84
      %s85 = sphi 0, %s82
      %s86 = sphi 0, %s85
      %s102 = sphi 0, %s86
      %s106 = sphi 0, %s106
      %s108 = sphi 0, %s106
      %s109 = sphi 0, %s108
      %s123 = sphi 0, %s109
      %s127 = sphi 0, %s127
      %s129 = sphi 0, %s127
      %s130 = sphi 0, %s129
      %s144 = sphi 0, %s130
      %s148 = sphi 0, %s148
      %s150 = sphi 0, %s148
      %s151 = sphi 0, %s150
      %s165 = sphi 0, %s151
      %s169 = sphi 0, %s169
      %s171 = sphi 0, %s169
      %s172 = sphi 0, %s171
      %s186 = sphi 0, %s172
      %s190 = sphi 0, %s190
      %s192 = sphi 0, %s190
      %s193 = sphi 0, %s192
      %s207 = sphi 0, %s193
      %s211 = sphi 0, %s211
      %s213 = sphi 0, %s211
      %s214 = sphi 0, %s213
      %s228 = sphi 0, %s214
      %s232 = sphi 0, %s232
      %s234 = sphi 0, %s232
      %s235 = sphi 0, %s234
      %s249 = sphi 0, %s235
      %s253 = sphi 0, %s253
      %s255 = sphi 0, %s253
      %s256 = sphi 0, %s255
      %s270 = sphi 0, %s256
      %s274 = sphi 0, %s274
      %s276 = sphi 0, %s274
      %s277 = sphi 0, %s276
      %s291 = sphi 0, %s277
    $region4: #{tpu_custom_call.1} parent=1 // loop_header_branch
      %28 = sbr.rel (%p26) target = $region8
    $region5: #{tpu_custom_call.1} parent=1 // loop_body
      %s30 = ssub.s32 %s25, 1
      %s31 = ssub.s32 %s25, 2
      %s41 = sadd.s32 1, %s34
      %p42 = scmp.ge.s32.totalorder %s41, 2
      %s43 = scalar_select %p42, 0, %s41
      %s44 = sadd.s32 1, %s33
      %s45 = scalar_select %p42, %s44, %s33
      %p46 = scmp.ge.s32.totalorder %s45, 2
      %s47 = scalar_select %p46, 0, %s45
      %s48 = sadd.s32 1, %s32
      %s49 = scalar_select %p46, %s48, %s32
      %p50 = scmp.ge.s32.totalorder %s49, 2
      %s51 = scalar_select %p50, 0, %s49
      %s52 = ssub.s32 %s33, %s47
      %s53 = ssub.s32 %s34, %s43
      %s54 = sor.u32 %s52, %s53
      %p55 = scmp.eq.s32.totalorder %s54, 0
      %s57 = sadd.s32 %s56, 1
      %s58 = scalar_select %p55, %s56, %s57
      %p61 = pneg %p55
      %p62 = scmp.eq.s32.totalorder %s25, 7
      %p63 = por %p61, %p62
      %p64 = scmp.ne.s32.totalorder %s56, %s59
      %p65 = scmp.eq.s32.totalorder %s25, 0
      %p66 = por %p64, %p65
      %p67 = scmp.ne.s32.totalorder %s56, %s59
      %p68 = scmp.eq.s32.totalorder %s30, 7
      %p69 = por %p67, %p68
      %p70 = scmp.ne.s32.totalorder %s59, %s60
      %p71 = scmp.eq.s32.totalorder %s30, 0
      %p72 = por %p70, %p71
      %p73 = scmp.ne.s32.totalorder %s59, %s60
      %p74 = scmp.eq.s32.totalorder %s31, 7
      %p75 = por %p73, %p74
      %p77 = scmp.ne.s32.totalorder %s60, %s76
      %p78 = scmp.eq.s32.totalorder %s31, 0
      %p79 = por %p77, %p78
      %s80 = ssub.s32 %s33, %s47
      %p81 = scmp.eq.s32.totalorder %s80, 0
      %s83 = sadd.s32 %s82, 1
      %s84 = scalar_select %p81, %s82, %s83
      %p87 = pneg %p81
      %p88 = scmp.eq.s32.totalorder %s25, 7
      %p89 = por %p87, %p88
      %p90 = scmp.ne.s32.totalorder %s82, %s85
      %p91 = scmp.eq.s32.totalorder %s25, 0
      %p92 = por %p90, %p91
      %p93 = scmp.ne.s32.totalorder %s82, %s85
      %p94 = scmp.eq.s32.totalorder %s30, 7
      %p95 = por %p93, %p94
      %p96 = scmp.ne.s32.totalorder %s85, %s86
      %p97 = scmp.eq.s32.totalorder %s30, 0
      %p98 = por %p96, %p97
      %p99 = scmp.ne.s32.totalorder %s85, %s86
      %p100 = scmp.eq.s32.totalorder %s31, 7
      %p101 = por %p99, %p100
      %p103 = scmp.ne.s32.totalorder %s86, %s102
      %p104 = scmp.eq.s32.totalorder %s31, 0
      %p105 = por %p103, %p104
      %s107 = sadd.s32 %s106, 1
      %p110 = scmp.eq.s32.totalorder %s25, 7
      %p111 = scmp.ne.s32.totalorder %s106, %s108
      %p112 = scmp.eq.s32.totalorder %s25, 0
      %p113 = por %p111, %p112
      %p114 = scmp.ne.s32.totalorder %s106, %s108
      %p115 = scmp.eq.s32.totalorder %s30, 7
      %p116 = por %p114, %p115
      %p117 = scmp.ne.s32.totalorder %s108, %s109
      %p118 = scmp.eq.s32.totalorder %s30, 0
      %p119 = por %p117, %p118
      %p120 = scmp.ne.s32.totalorder %s108, %s109
      %p121 = scmp.eq.s32.totalorder %s31, 7
      %p122 = por %p120, %p121
      %p124 = scmp.ne.s32.totalorder %s109, %s123
      %p125 = scmp.eq.s32.totalorder %s31, 0
      %p126 = por %p124, %p125
      %s128 = sadd.s32 %s127, 1
      %p131 = scmp.eq.s32.totalorder %s25, 7
      %p132 = scmp.ne.s32.totalorder %s127, %s129
      %p133 = scmp.eq.s32.totalorder %s25, 0
      %p134 = por %p132, %p133
      %p135 = scmp.ne.s32.totalorder %s127, %s129
      %p136 = scmp.eq.s32.totalorder %s30, 7
      %p137 = por %p135, %p136
      %p138 = scmp.ne.s32.totalorder %s129, %s130
      %p139 = scmp.eq.s32.totalorder %s30, 0
      %p140 = por %p138, %p139
      %p141 = scmp.ne.s32.totalorder %s129, %s130
      %p142 = scmp.eq.s32.totalorder %s31, 7
      %p143 = por %p141, %p142
      %p145 = scmp.ne.s32.totalorder %s130, %s144
      %p146 = scmp.eq.s32.totalorder %s31, 0
      %p147 = por %p145, %p146
      %s149 = sadd.s32 %s148, 1
      %p152 = scmp.eq.s32.totalorder %s25, 7
      %p153 = scmp.ne.s32.totalorder %s148, %s150
      %p154 = scmp.eq.s32.totalorder %s25, 0
      %p155 = por %p153, %p154
      %p156 = scmp.ne.s32.totalorder %s148, %s150
      %p157 = scmp.eq.s32.totalorder %s30, 7
      %p158 = por %p156, %p157
      %p159 = scmp.ne.s32.totalorder %s150, %s151
      %p160 = scmp.eq.s32.totalorder %s30, 0
      %p161 = por %p159, %p160
      %p162 = scmp.ne.s32.totalorder %s150, %s151
      %p163 = scmp.eq.s32.totalorder %s31, 7
      %p164 = por %p162, %p163
      %p166 = scmp.ne.s32.totalorder %s151, %s165
      %p167 = scmp.eq.s32.totalorder %s31, 0
      %p168 = por %p166, %p167
      %s170 = sadd.s32 %s169, 1
      %p173 = scmp.eq.s32.totalorder %s25, 7
      %p174 = scmp.ne.s32.totalorder %s169, %s171
      %p175 = scmp.eq.s32.totalorder %s25, 0
      %p176 = por %p174, %p175
      %p177 = scmp.ne.s32.totalorder %s169, %s171
      %p178 = scmp.eq.s32.totalorder %s30, 7
      %p179 = por %p177, %p178
      %p180 = scmp.ne.s32.totalorder %s171, %s172
      %p181 = scmp.eq.s32.totalorder %s30, 0
      %p182 = por %p180, %p181
      %p183 = scmp.ne.s32.totalorder %s171, %s172
      %p184 = scmp.eq.s32.totalorder %s31, 7
      %p185 = por %p183, %p184
      %p187 = scmp.ne.s32.totalorder %s172, %s186
      %p188 = scmp.eq.s32.totalorder %s31, 0
      %p189 = por %p187, %p188
      %s191 = sadd.s32 %s190, 1
      %p194 = scmp.eq.s32.totalorder %s25, 7
      %p195 = scmp.ne.s32.totalorder %s190, %s192
      %p196 = scmp.eq.s32.totalorder %s25, 0
      %p197 = por %p195, %p196
      %p198 = scmp.ne.s32.totalorder %s190, %s192
      %p199 = scmp.eq.s32.totalorder %s30, 7
      %p200 = por %p198, %p199
      %p201 = scmp.ne.s32.totalorder %s192, %s193
      %p202 = scmp.eq.s32.totalorder %s30, 0
      %p203 = por %p201, %p202
      %p204 = scmp.ne.s32.totalorder %s192, %s193
      %p205 = scmp.eq.s32.totalorder %s31, 7
      %p206 = por %p204, %p205
      %p208 = scmp.ne.s32.totalorder %s193, %s207
      %p209 = scmp.eq.s32.totalorder %s31, 0
      %p210 = por %p208, %p209
      %s212 = sadd.s32 %s211, 1
      %p215 = scmp.eq.s32.totalorder %s25, 7
      %p216 = scmp.ne.s32.totalorder %s211, %s213
      %p217 = scmp.eq.s32.totalorder %s25, 0
      %p218 = por %p216, %p217
      %p219 = scmp.ne.s32.totalorder %s211, %s213
      %p220 = scmp.eq.s32.totalorder %s30, 7
      %p221 = por %p219, %p220
      %p222 = scmp.ne.s32.totalorder %s213, %s214
      %p223 = scmp.eq.s32.totalorder %s30, 0
      %p224 = por %p222, %p223
      %p225 = scmp.ne.s32.totalorder %s213, %s214
      %p226 = scmp.eq.s32.totalorder %s31, 7
      %p227 = por %p225, %p226
      %p229 = scmp.ne.s32.totalorder %s214, %s228
      %p230 = scmp.eq.s32.totalorder %s31, 0
      %p231 = por %p229, %p230
      %s233 = sadd.s32 %s232, 1
      %p236 = scmp.eq.s32.totalorder %s25, 7
      %p237 = scmp.ne.s32.totalorder %s232, %s234
      %p238 = scmp.eq.s32.totalorder %s25, 0
      %p239 = por %p237, %p238
      %p240 = scmp.ne.s32.totalorder %s232, %s234
      %p241 = scmp.eq.s32.totalorder %s30, 7
      %p242 = por %p240, %p241
      %p243 = scmp.ne.s32.totalorder %s234, %s235
      %p244 = scmp.eq.s32.totalorder %s30, 0
      %p245 = por %p243, %p244
      %p246 = scmp.ne.s32.totalorder %s234, %s235
      %p247 = scmp.eq.s32.totalorder %s31, 7
      %p248 = por %p246, %p247
      %p250 = scmp.ne.s32.totalorder %s235, %s249
      %p251 = scmp.eq.s32.totalorder %s31, 0
      %p252 = por %p250, %p251
      %s254 = sadd.s32 %s253, 1
      %p257 = scmp.eq.s32.totalorder %s25, 7
      %p258 = scmp.ne.s32.totalorder %s253, %s255
      %p259 = scmp.eq.s32.totalorder %s25, 0
      %p260 = por %p258, %p259
      %p261 = scmp.ne.s32.totalorder %s253, %s255
      %p262 = scmp.eq.s32.totalorder %s30, 7
      %p263 = por %p261, %p262
      %p264 = scmp.ne.s32.totalorder %s255, %s256
      %p265 = scmp.eq.s32.totalorder %s30, 0
      %p266 = por %p264, %p265
      %p267 = scmp.ne.s32.totalorder %s255, %s256
      %p268 = scmp.eq.s32.totalorder %s31, 7
      %p269 = por %p267, %p268
      %p271 = scmp.ne.s32.totalorder %s256, %s270
      %p272 = scmp.eq.s32.totalorder %s31, 0
      %p273 = por %p271, %p272
      %s275 = sadd.s32 %s274, 1
      %p278 = scmp.eq.s32.totalorder %s25, 7
      %p279 = scmp.ne.s32.totalorder %s274, %s276
      %p280 = scmp.eq.s32.totalorder %s25, 0
      %p281 = por %p279, %p280
      %p282 = scmp.ne.s32.totalorder %s274, %s276
      %p283 = scmp.eq.s32.totalorder %s30, 7
      %p284 = por %p282, %p283
      %p285 = scmp.ne.s32.totalorder %s276, %s277
      %p286 = scmp.eq.s32.totalorder %s30, 0
      %p287 = por %p285, %p286
      %p288 = scmp.ne.s32.totalorder %s276, %s277
      %p289 = scmp.eq.s32.totalorder %s31, 7
      %p290 = por %p288, %p289
      %p292 = scmp.ne.s32.totalorder %s277, %s291
      %p293 = scmp.eq.s32.totalorder %s31, 0
      %p294 = por %p292, %p293
      %p295 = scmp.le.s32.totalorder 1, %s25
      %p296 = scmp.lt.s32.totalorder %s25, 9
      %p297 = pnand %p295, %p296
      %p298 = pneg %p297
      // Predicated region
      $region9: #{tpu_custom_call.1} parent=5 // pred_check
        _
      $region10: #{tpu_custom_call.1} parent=5 // pred_check_branch
        %300 = sbr.rel (%p297) target = $region12
      $region11: #{tpu_custom_call.1} parent=5 // pred_region
        %s301 = ssub.s32 %s25, 1
        // Predicated region
        $region13: #{tpu_custom_call.1} parent=11 // pred_check
          %p302 = pneg %p119
        $region14: #{tpu_custom_call.1} parent=11 // pred_check_branch
          %304 = sbr.rel (%p302) target = $region16
        $region15: #{tpu_custom_call.1} parent=11 // pred_region
          %s306 = ssub.s32 4096, 4096
          %307 = vsyncadd [#allocation9], %s306
          %s308 = sshll.u32 [#allocation10], 4
          %s309 = int_to_ptr.vmem [resolvable:$true] %s308
          %314 = dma.hbm_to_vmem [thread:$0]  %s2, 4096, %s309, [#allocation9], 128, 128, 8
        $region16: #{tpu_custom_call.1} parent=11 // pred_fallthru
          _
        // Predicated region
        $region17: #{tpu_custom_call.1} parent=11 // pred_check
          %p315 = pneg %p140
        $region18: #{tpu_custom_call.1} parent=11 // pred_check_branch
          %317 = sbr.rel (%p315) target = $region20
        $region19: #{tpu_custom_call.1} parent=11 // pred_region
          _
        $region20: #{tpu_custom_call.1} parent=11 // pred_fallthru
          _
        // Predicated region
        $region21: #{tpu_custom_call.1} parent=11 // pred_check
          %p318 = pneg %p161
        $region22: #{tpu_custom_call.1} parent=11 // pred_check_branch
          %320 = sbr.rel (%p318) target = $region24
        $region23: #{tpu_custom_call.1} parent=11 // pred_region
          %s322 = ssub.s32 4096, 4096
          %323 = vsyncadd [#allocation12], %s322
          %s324 = sshll.u32 [#allocation11], 4
          %s325 = int_to_ptr.vmem [resolvable:$true] %s324
          %330 = dma.hbm_to_vmem [thread:$0]  %s4, 4096, %s325, [#allocation12], 128, 128, 8
        $region24: #{tpu_custom_call.1} parent=11 // pred_fallthru
          _
        // Predicated region
        $region25: #{tpu_custom_call.1} parent=11 // pred_check
          %p331 = pneg %p182
        $region26: #{tpu_custom_call.1} parent=11 // pred_check_branch
          %333 = sbr.rel (%p331) target = $region28
        $region27: #{tpu_custom_call.1} parent=11 // pred_region
          _
        $region28: #{tpu_custom_call.1} parent=11 // pred_fallthru
          _
        // Predicated region
        $region29: #{tpu_custom_call.1} parent=11 // pred_check
          %p334 = pneg %p203
        $region30: #{tpu_custom_call.1} parent=11 // pred_check_branch
          %336 = sbr.rel (%p334) target = $region32
        $region31: #{tpu_custom_call.1} parent=11 // pred_region
          %s338 = ssub.s32 4096, 4096
          %339 = vsyncadd [#allocation12], %s338
          %s340 = sshll.u32 [#allocation13], 4
          %s341 = int_to_ptr.vmem [resolvable:$true] %s340
          %346 = dma.hbm_to_vmem [thread:$0]  %s6, 4096, %s341, [#allocation12], 128, 128, 8
        $region32: #{tpu_custom_call.1} parent=11 // pred_fallthru
          _
        // Predicated region
        $region33: #{tpu_custom_call.1} parent=11 // pred_check
          %p347 = pneg %p224
        $region34: #{tpu_custom_call.1} parent=11 // pred_check_branch
          %349 = sbr.rel (%p347) target = $region36
        $region35: #{tpu_custom_call.1} parent=11 // pred_region
          _
        $region36: #{tpu_custom_call.1} parent=11 // pred_fallthru
          _
        // Predicated region
        $region37: #{tpu_custom_call.1} parent=11 // pred_check
          %p350 = pneg %p245
        $region38: #{tpu_custom_call.1} parent=11 // pred_check_branch
          %352 = sbr.rel (%p350) target = $region40
        $region39: #{tpu_custom_call.1} parent=11 // pred_region
          %s354 = ssub.s32 6144, 6144
          %355 = vsyncadd [#allocation15], %s354
          %s356 = sshll.u32 [#allocation14], 4
          %s357 = int_to_ptr.vmem [resolvable:$true] %s356
          %362 = dma.hbm_to_vmem [thread:$0]  %s8, 6144, %s357, [#allocation15], 128, 128, 8
        $region40: #{tpu_custom_call.1} parent=11 // pred_fallthru
          _
        // Predicated region
        $region41: #{tpu_custom_call.1} parent=11 // pred_check
          %p363 = pneg %p266
        $region42: #{tpu_custom_call.1} parent=11 // pred_check_branch
          %365 = sbr.rel (%p363) target = $region44
        $region43: #{tpu_custom_call.1} parent=11 // pred_region
          _
        $region44: #{tpu_custom_call.1} parent=11 // pred_fallthru
          _
      $region12: #{tpu_custom_call.1} parent=5 // pred_fallthru
        _
      %p366 = scmp.lt.s32.totalorder %s25, 8
      // Predicated region
      $region45: #{tpu_custom_call.1} parent=5 // pred_check
        %p367 = pneg %p366
      $region46: #{tpu_custom_call.1} parent=5 // pred_check_branch
        %369 = sbr.rel (%p367) target = $region48
      $region47: #{tpu_custom_call.1} parent=5 // pred_region
        // Predicated region
        $region49: #{tpu_custom_call.1} parent=47 // pred_check
          %p370 = pneg %p66
        $region50: #{tpu_custom_call.1} parent=47 // pred_check_branch
          %372 = sbr.rel (%p370) target = $region52
        $region51: #{tpu_custom_call.1} parent=47 // pred_region
          %s373 = sand.u32 %s56, 1
          %s374 = scalar_lea.sflag [#allocation6], %s373
          %s375 = sand.u32 %s56, 1
          %s376 = smul.addr %s375, 128
          %s377 = scalar_lea.vmem [#allocation5], %s376
          %s378 = smul.u32 16, %s33
          %s380 = ssub.s32 2048, 2048
          %381 = vsyncadd %s374, %s380
          %s382 = smul.addr %s378, 2
          %s383 = sadd.s32 %s34, %s382
          %s384 = smul.addr %s383, 128
          %s385 = scalar_lea.hbm %s0, %s384
          %s386 = sshll.u32 %s377, 4
          %s387 = int_to_ptr.vmem [resolvable:$true] %s386
          %392 = dma.hbm_to_vmem [thread:$0]  %s385, 2048, %s387, %s374, 256, 128, 8
        $region52: #{tpu_custom_call.1} parent=47 // pred_fallthru
          _
        // Predicated region
        $region53: #{tpu_custom_call.1} parent=47 // pred_check
          %p393 = pneg %p92
        $region54: #{tpu_custom_call.1} parent=47 // pred_check_branch
          %395 = sbr.rel (%p393) target = $region56
        $region55: #{tpu_custom_call.1} parent=47 // pred_region
          %s396 = sand.u32 %s25, 1
          %s397 = scalar_lea.sflag [#allocation9], %s396
          %s398 = sand.u32 %s82, 1
          %s399 = smul.addr %s398, 2
          %s400 = scalar_lea.vmem [#allocation8], %s399
          %s402 = ssub.s32 32, 32
          %403 = vsyncadd %s397, %s402
          %s404 = smul.addr %s33, 32
          %s405 = scalar_lea.hbm %s1, %s404
          %s407 = sshll.u32 %s400, 4
          %s408 = int_to_ptr.vmem [resolvable:$true] %s407
          %410 = dma.hbm_to_vmem [thread:$0]  %s405, 32, %s408, %s397
        $region56: #{tpu_custom_call.1} parent=47 // pred_fallthru
          _
      $region48: #{tpu_custom_call.1} parent=5 // pred_fallthru
        _
      %p411 = scmp.le.s32.totalorder 1, %s25
      %p412 = scmp.lt.s32.totalorder %s25, 9
      %p413 = pnand %p411, %p412
      %p414 = pneg %p413
      // Predicated region
      $region57: #{tpu_custom_call.1} parent=5 // pred_check
        _
      $region58: #{tpu_custom_call.1} parent=5 // pred_check_branch
        %416 = sbr.rel (%p413) target = $region60
      $region59: #{tpu_custom_call.1} parent=5 // pred_region
        %s417 = ssub.s32 %s25, 1
        %s418 = sand.u32 %s59, 1
        %s419 = scalar_lea.sflag [#allocation6], %s418
        %s420 = sand.u32 %s59, 1
        %s421 = smul.addr %s420, 128
        %s422 = scalar_lea.vmem [#allocation5], %s421
        // Predicated region
        $region61: #{tpu_custom_call.1} parent=59 // pred_check
          %p423 = pneg %p72
        $region62: #{tpu_custom_call.1} parent=59 // pred_check_branch
          %425 = sbr.rel (%p423) target = $region64
        $region63: #{tpu_custom_call.1} parent=59 // pred_region
          %426 = dma.done %s419, 2048
        $region64: #{tpu_custom_call.1} parent=59 // pred_fallthru
          _
        %s427 = sand.u32 %s30, 1
        %s428 = scalar_lea.sflag [#allocation9], %s427
        %s429 = sand.u32 %s85, 1
        %s430 = smul.addr %s429, 2
        %s431 = scalar_lea.vmem [#allocation8], %s430
        // Predicated region
        $region65: #{tpu_custom_call.1} parent=59 // pred_check
          %p432 = pneg %p98
        $region66: #{tpu_custom_call.1} parent=59 // pred_check_branch
          %434 = sbr.rel (%p432) target = $region68
        $region67: #{tpu_custom_call.1} parent=59 // pred_region
          %435 = dma.done %s428, 32
        $region68: #{tpu_custom_call.1} parent=59 // pred_fallthru
          _
        // Predicated region
        $region69: #{tpu_custom_call.1} parent=59 // pred_check
          %p436 = pneg %p119
        $region70: #{tpu_custom_call.1} parent=59 // pred_check_branch
          %438 = sbr.rel (%p436) target = $region72
        $region71: #{tpu_custom_call.1} parent=59 // pred_region
          %439 = dma.done [#allocation9], 4096
        $region72: #{tpu_custom_call.1} parent=59 // pred_fallthru
          _
        // Predicated region
        $region73: #{tpu_custom_call.1} parent=59 // pred_check
          %p440 = pneg %p161
        $region74: #{tpu_custom_call.1} parent=59 // pred_check_branch
          %442 = sbr.rel (%p440) target = $region76
        $region75: #{tpu_custom_call.1} parent=59 // pred_region
          %443 = dma.done [#allocation12], 4096
        $region76: #{tpu_custom_call.1} parent=59 // pred_fallthru
          _
        // Predicated region
        $region77: #{tpu_custom_call.1} parent=59 // pred_check
          %p444 = pneg %p203
        $region78: #{tpu_custom_call.1} parent=59 // pred_check_branch
          %446 = sbr.rel (%p444) target = $region80
        $region79: #{tpu_custom_call.1} parent=59 // pred_region
          %447 = dma.done [#allocation12], 4096
        $region80: #{tpu_custom_call.1} parent=59 // pred_fallthru
          _
        // Predicated region
        $region81: #{tpu_custom_call.1} parent=59 // pred_check
          %p448 = pneg %p245
        $region82: #{tpu_custom_call.1} parent=59 // pred_check_branch
          %450 = sbr.rel (%p448) target = $region84
        $region83: #{tpu_custom_call.1} parent=59 // pred_region
          %451 = dma.done [#allocation15], 6144
        $region84: #{tpu_custom_call.1} parent=59 // pred_fallthru
          _
        %s452 = sand.u32 %s59, 1
        %s453 = scalar_lea.sflag [#allocation6], %s452
        %s454 = sand.u32 %s59, 1
        %s455 = smul.addr %s454, 128
        %s456 = scalar_lea.vmem [#allocation5], %s455
        %p457 = pneg %p72
        %p458 = pneg %p69
        %s459 = sand.u32 %s30, 1
        %s460 = scalar_lea.sflag [#allocation9], %s459
        %s461 = sand.u32 %s85, 1
        %s462 = smul.addr %s461, 2
        %s463 = scalar_lea.vmem [#allocation8], %s462
        %p464 = pneg %p98
        %p465 = pneg %p95
        %p466 = pneg %p119
        %p467 = pneg %p116
        %p468 = pneg %p140
        %p469 = pneg %p137
        %p470 = pneg %p161
        %p471 = pneg %p158
        %p472 = pneg %p182
        %p473 = pneg %p179
        %p474 = pneg %p203
        %p475 = pneg %p200
        %p476 = pneg %p224
        %p477 = pneg %p221
        %p478 = pneg %p245
        %p479 = pneg %p242
        %p480 = pneg %p266
        %p481 = pneg %p263
        %p482 = pneg %p287
        %p483 = pneg %p284
        %s484 = smul.u32 16, %s36
        %s485 = smul.u32 %s37, 128
        %s486 = smul.u32 %s36, 128
        %p487 = scmp.lt.s32.totalorder %s35, 0
        %s488 = ssub.s32 0, %s35
        %s489 = scalar_select %p487, %s488, %s35
        %s490 = sand.u32 %s489, 1
        %s491 = ssub.s32 0, %s490
        %s492 = scalar_select %p487, %s491, %s490
        %p493 = scmp.ne.s32.totalorder %s492, 0
        %p494 = scmp.lt.s32.totalorder %s492, 0
        %p495 = pnand %p494, %p493
        %p496 = pneg %p495
        %s497 = sadd.s32 %s492, 2
        %s498 = scalar_select %p496, %s497, %s492
        %s499 = ssub.s32 1, %s498
        %p500 = scmp.eq.s32.totalorder %s35, 0
        %p501 = scmp.eq.s32.totalorder %s36, 0
        %p502 = pnand %p500, %p501
        %p503 = pneg %p502
        %p504 = scmp.eq.s32.totalorder %s37, 0
        %p505 = pnand %p503, %p504
        %p506 = pneg %p505
        // Predicated region
        $region85: #{tpu_custom_call.1} parent=59 // pred_check
          _
        $region86: #{tpu_custom_call.1} parent=59 // pred_check_branch
          %508 = sbr.rel (%p505) target = $region88
        $region87: #{tpu_custom_call.1} parent=59 // pred_region
          %509 = vst [vmem:[#allocation4] sm:$0x3] 0.0
        $region88: #{tpu_custom_call.1} parent=59 // pred_fallthru
          _
        // Predicated region
        $region89: #{tpu_custom_call.1} parent=59 // pred_check
          _
        $region90: #{tpu_custom_call.1} parent=59 // pred_check_branch
          %511 = sbr.rel (%p502) target = $region92
        $region91: #{tpu_custom_call.1} parent=59 // pred_region
          %s512 = scalar_lea.vmem [#allocation10], %s485
          %v513 = vld [vmem:[%s512] sm:$0xff]
          %v514 = vld [vmem:[%s512 + $0x8] sm:$0xff]
          %v515 = vld [vmem:[%s512 + $0x10] sm:$0xff]
          %v516 = vld [vmem:[%s512 + $0x18] sm:$0xff]
          %v517 = vld [vmem:[%s512 + $0x20] sm:$0xff]
          %v518 = vld [vmem:[%s512 + $0x28] sm:$0xff]
          %v519 = vld [vmem:[%s512 + $0x30] sm:$0xff]
          %v520 = vld [vmem:[%s512 + $0x38] sm:$0xff]
          %v521 = vld [vmem:[%s512 + $0x40] sm:$0xff]
          %v522 = vld [vmem:[%s512 + $0x48] sm:$0xff]
          %v523 = vld [vmem:[%s512 + $0x50] sm:$0xff]
          %v524 = vld [vmem:[%s512 + $0x58] sm:$0xff]
          %v525 = vld [vmem:[%s512 + $0x60] sm:$0xff]
          %v526 = vld [vmem:[%s512 + $0x68] sm:$0xff]
          %v527 = vld [vmem:[%s512 + $0x70] sm:$0xff]
          %v528 = vld [vmem:[%s512 + $0x78] sm:$0xff]
          %s529 = scalar_lea.vmem [#allocation2], %s485
          %530 = vst [vmem:[%s529] sm:$0xff] %v513
          %531 = vst [vmem:[%s529 + $0x8] sm:$0xff] %v514
          %532 = vst [vmem:[%s529 + $0x10] sm:$0xff] %v515
          %533 = vst [vmem:[%s529 + $0x18] sm:$0xff] %v516
          %534 = vst [vmem:[%s529 + $0x20] sm:$0xff] %v517
          %535 = vst [vmem:[%s529 + $0x28] sm:$0xff] %v518
          %536 = vst [vmem:[%s529 + $0x30] sm:$0xff] %v519
          %537 = vst [vmem:[%s529 + $0x38] sm:$0xff] %v520
          %538 = vst [vmem:[%s529 + $0x40] sm:$0xff] %v521
          %539 = vst [vmem:[%s529 + $0x48] sm:$0xff] %v522
          %540 = vst [vmem:[%s529 + $0x50] sm:$0xff] %v523
          %541 = vst [vmem:[%s529 + $0x58] sm:$0xff] %v524
          %542 = vst [vmem:[%s529 + $0x60] sm:$0xff] %v525
          %543 = vst [vmem:[%s529 + $0x68] sm:$0xff] %v526
          %544 = vst [vmem:[%s529 + $0x70] sm:$0xff] %v527
          %545 = vst [vmem:[%s529 + $0x78] sm:$0xff] %v528
        $region92: #{tpu_custom_call.1} parent=59 // pred_fallthru
          _
        // Predicated region
        $region93: #{tpu_custom_call.1} parent=59 // pred_check
          %p546 = pneg %p504
        $region94: #{tpu_custom_call.1} parent=59 // pred_check_branch
          %548 = sbr.rel (%p546) target = $region96
        $region95: #{tpu_custom_call.1} parent=59 // pred_region
          %549 = vst [vmem:[#allocation3] sm:$0xff] 0.0
          %550 = vst [vmem:[#allocation3 + $0x8] sm:$0xff] 0.0
          %551 = vst [vmem:[#allocation3 + $0x10] sm:$0xff] 0.0
          %552 = vst [vmem:[#allocation3 + $0x18] sm:$0xff] 0.0
          %553 = vst [vmem:[#allocation3 + $0x20] sm:$0xff] 0.0
          %554 = vst [vmem:[#allocation3 + $0x28] sm:$0xff] 0.0
          %555 = vst [vmem:[#allocation3 + $0x30] sm:$0xff] 0.0
          %556 = vst [vmem:[#allocation3 + $0x38] sm:$0xff] 0.0
          %557 = vst [vmem:[#allocation3 + $0x40] sm:$0xff] 0.0
          %558 = vst [vmem:[#allocation3 + $0x48] sm:$0xff] 0.0
          %559 = vst [vmem:[#allocation3 + $0x50] sm:$0xff] 0.0
          %560 = vst [vmem:[#allocation3 + $0x58] sm:$0xff] 0.0
          %561 = vst [vmem:[#allocation3 + $0x60] sm:$0xff] 0.0
          %562 = vst [vmem:[#allocation3 + $0x68] sm:$0xff] 0.0
          %563 = vst [vmem:[#allocation3 + $0x70] sm:$0xff] 0.0
          %564 = vst [vmem:[#allocation3 + $0x78] sm:$0xff] 0.0
        $region96: #{tpu_custom_call.1} parent=59 // pred_fallthru
          _
        %s565 = smul.u32 %s498, 256
        %s566 = sadd.s32 %s485, %s565
        %s567 = scalar_lea.vmem [#allocation2], %s566
        %v568 = vld [vmem:[%s567] sm:$0xff]
        %v569 = vld [vmem:[%s567 + $0x8] sm:$0xff]
        %v570 = vld [vmem:[%s567 + $0x10] sm:$0xff]
        %v571 = vld [vmem:[%s567 + $0x18] sm:$0xff]
        %v572 = vld [vmem:[%s567 + $0x20] sm:$0xff]
        %v573 = vld [vmem:[%s567 + $0x28] sm:$0xff]
        %v574 = vld [vmem:[%s567 + $0x30] sm:$0xff]
        %v575 = vld [vmem:[%s567 + $0x38] sm:$0xff]
        %v576 = vld [vmem:[%s567 + $0x40] sm:$0xff]
        %v577 = vld [vmem:[%s567 + $0x48] sm:$0xff]
        %v578 = vld [vmem:[%s567 + $0x50] sm:$0xff]
        %v579 = vld [vmem:[%s567 + $0x58] sm:$0xff]
        %v580 = vld [vmem:[%s567 + $0x60] sm:$0xff]
        %v581 = vld [vmem:[%s567 + $0x68] sm:$0xff]
        %v582 = vld [vmem:[%s567 + $0x70] sm:$0xff]
        %v583 = vld [vmem:[%s567 + $0x78] sm:$0xff]
        %v584 = vld [vmem:[#allocation3] sm:$0xff]
        %v585 = vld [vmem:[#allocation3 + $0x8] sm:$0xff]
        %v586 = vld [vmem:[#allocation3 + $0x10] sm:$0xff]
        %v587 = vld [vmem:[#allocation3 + $0x18] sm:$0xff]
        %v588 = vld [vmem:[#allocation3 + $0x20] sm:$0xff]
        %v589 = vld [vmem:[#allocation3 + $0x28] sm:$0xff]
        %v590 = vld [vmem:[#allocation3 + $0x30] sm:$0xff]
        %v591 = vld [vmem:[#allocation3 + $0x38] sm:$0xff]
        %v592 = vld [vmem:[#allocation3 + $0x40] sm:$0xff]
        %v593 = vld [vmem:[#allocation3 + $0x48] sm:$0xff]
        %v594 = vld [vmem:[#allocation3 + $0x50] sm:$0xff]
        %v595 = vld [vmem:[#allocation3 + $0x58] sm:$0xff]
        %v596 = vld [vmem:[#allocation3 + $0x60] sm:$0xff]
        %v597 = vld [vmem:[#allocation3 + $0x68] sm:$0xff]
        %v598 = vld [vmem:[#allocation3 + $0x70] sm:$0xff]
        %v599 = vld [vmem:[#allocation3 + $0x78] sm:$0xff]
        %v600 = vld [vmem:[%s422] sm:$0xff]
        %v601 = vld [vmem:[%s422 + $0x8] sm:$0xff]
        %v602 = vld [vmem:[%s422 + $0x10] sm:$0xff]
        %v603 = vld [vmem:[%s422 + $0x18] sm:$0xff]
        %v604 = vld [vmem:[%s422 + $0x20] sm:$0xff]
        %v605 = vld [vmem:[%s422 + $0x28] sm:$0xff]
        %v606 = vld [vmem:[%s422 + $0x30] sm:$0xff]
        %v607 = vld [vmem:[%s422 + $0x38] sm:$0xff]
        %v608 = vld [vmem:[%s422 + $0x40] sm:$0xff]
        %v609 = vld [vmem:[%s422 + $0x48] sm:$0xff]
        %v610 = vld [vmem:[%s422 + $0x50] sm:$0xff]
        %v611 = vld [vmem:[%s422 + $0x58] sm:$0xff]
        %v612 = vld [vmem:[%s422 + $0x60] sm:$0xff]
        %v613 = vld [vmem:[%s422 + $0x68] sm:$0xff]
        %v614 = vld [vmem:[%s422 + $0x70] sm:$0xff]
        %v615 = vld [vmem:[%s422 + $0x78] sm:$0xff]
        %616 = vmatprep.subr.mxu0 0.0
        %617 = vmatpush1.msra.mxu0 %v568
        %618 = vmatprep.subr.mxu0 0.0
        %619 = vmatpush1.msra.mxu0 %v569
        %620 = vmatprep.subr.mxu0 0.0
        %621 = vmatpush1.msra.mxu0 %v570
        %622 = vmatprep.subr.mxu0 0.0
        %623 = vmatpush1.msra.mxu0 %v571
        %624 = vmatprep.subr.mxu0 0.0
        %625 = vmatpush1.msra.mxu0 %v572
        %626 = vmatprep.subr.mxu0 0.0
        %627 = vmatpush1.msra.mxu0 %v573
        %628 = vmatprep.subr.mxu0 0.0
        %629 = vmatpush1.msra.mxu0 %v574
        %630 = vmatprep.subr.mxu0 0.0
        %631 = vmatpush1.msra.mxu0 %v575
        %632 = vmatprep.subr.mxu0 0.0
        %633 = vmatpush1.msra.mxu0 %v576
        %634 = vmatprep.subr.mxu0 0.0
        %635 = vmatpush1.msra.mxu0 %v577
        %636 = vmatprep.subr.mxu0 0.0
        %637 = vmatpush1.msra.mxu0 %v578
        %638 = vmatprep.subr.mxu0 0.0
        %639 = vmatpush1.msra.mxu0 %v579
        %640 = vmatprep.subr.mxu0 0.0
        %641 = vmatpush1.msra.mxu0 %v580
        %642 = vmatprep.subr.mxu0 0.0
        %643 = vmatpush1.msra.mxu0 %v581
        %644 = vmatprep.subr.mxu0 0.0
        %645 = vmatpush1.msra.mxu0 %v582
        %646 = vmatprep.subr.mxu0 0.0
        %647 = vmatpush1.msra.mxu0 %v583
        %648 = vmatprep.subr.mxu0 0.0
        %649 = vmatpush1.msra.mxu0 0.0
        %650 = vmatprep.subr.mxu0 0.0
        %651 = vmatpush1.msra.mxu0 0.0
        %652 = vmatprep.subr.mxu0 0.0
        %653 = vmatpush1.msra.mxu0 0.0
        %654 = vmatprep.subr.mxu0 0.0
        %655 = vmatpush1.msra.mxu0 0.0
        %656 = vmatprep.subr.mxu0 0.0
        %657 = vmatpush1.msra.mxu0 0.0
        %658 = vmatprep.subr.mxu0 0.0
        %659 = vmatpush1.msra.mxu0 0.0
        %660 = vmatprep.subr.mxu0 0.0
        %661 = vmatpush1.msra.mxu0 0.0
        %662 = vmatprep.subr.mxu0 0.0
        %663 = vmatpush1.msra.mxu0 0.0
        %664 = vmatprep.subr.mxu0 0.0
        %665 = vmatpush1.msra.mxu0 0.0
        %666 = vmatprep.subr.mxu0 0.0
        %667 = vmatpush1.msra.mxu0 0.0
        %668 = vmatprep.subr.mxu0 0.0
        %669 = vmatpush1.msra.mxu0 0.0
        %670 = vmatprep.subr.mxu0 0.0
        %671 = vmatpush1.msra.mxu0 0.0
        %672 = vmatprep.subr.mxu0 0.0
        %673 = vmatpush1.msra.mxu0 0.0
        %674 = vmatprep.subr.mxu0 0.0
        %675 = vmatpush1.msra.mxu0 0.0
        %676 = vmatprep.subr.mxu0 0.0
        %677 = vmatpush1.msra.mxu0 0.0
        %678 = vmatprep.subr.mxu0 0.0
        %679 = vmatpush1.msra.mxu0 0.0
        %680 = vmatprep.mubr.f32.mxu0 0.0
        %681 = vmatmul.mubr.f32.gmra.mrb[0].mxu0 %v600
        %v682 = vpop.f32.mrb[0].mxu0
        %v683 = vadd.f32 0.0, %v682
        %v684 = vpop.f32.mrb[0].mxu0
        %685 = vmatprep.mubr.f32.mxu0 0.0
        %686 = vmatmul.mubr.f32.gmra.mrb[0].mxu0 %v601
        %v687 = vpop.f32.mrb[0].mxu0
        %v688 = vadd.f32 0.0, %v687
        %v689 = vpop.f32.mrb[0].mxu0
        %690 = vmatprep.mubr.f32.mxu0 0.0
        %691 = vmatmul.mubr.f32.gmra.mrb[0].mxu0 %v602
        %v692 = vpop.f32.mrb[0].mxu0
        %v693 = vadd.f32 0.0, %v692
        %v694 = vpop.f32.mrb[0].mxu0
        %695 = vmatprep.mubr.f32.mxu0 0.0
        %696 = vmatmul.mubr.f32.gmra.mrb[0].mxu0 %v603
        %v697 = vpop.f32.mrb[0].mxu0
        %v698 = vadd.f32 0.0, %v697
        %v699 = vpop.f32.mrb[0].mxu0
        %700 = vmatprep.mubr.f32.mxu0 0.0
        %701 = vmatmul.mubr.f32.gmra.mrb[0].mxu0 %v604
        %v702 = vpop.f32.mrb[0].mxu0
        %v703 = vadd.f32 0.0, %v702
        %v704 = vpop.f32.mrb[0].mxu0
        %705 = vmatprep.mubr.f32.mxu0 0.0
        %706 = vmatmul.mubr.f32.gmra.mrb[0].mxu0 %v605
        %v707 = vpop.f32.mrb[0].mxu0
        %v708 = vadd.f32 0.0, %v707
        %v709 = vpop.f32.mrb[0].mxu0
        %710 = vmatprep.mubr.f32.mxu0 0.0
        %711 = vmatmul.mubr.f32.gmra.mrb[0].mxu0 %v606
        %v712 = vpop.f32.mrb[0].mxu0
        %v713 = vadd.f32 0.0, %v712
        %v714 = vpop.f32.mrb[0].mxu0
        %715 = vmatprep.mubr.f32.mxu0 0.0
        %716 = vmatmul.mubr.f32.gmra.mrb[0].mxu0 %v607
        %v717 = vpop.f32.mrb[0].mxu0
        %v718 = vadd.f32 0.0, %v717
        %v719 = vpop.f32.mrb[0].mxu0
        %720 = vmatprep.mubr.f32.mxu0 0.0
        %721 = vmatmul.mubr.f32.gmra.mrb[0].mxu0 %v608
        %v722 = vpop.f32.mrb[0].mxu0
        %v723 = vadd.f32 0.0, %v722
        %v724 = vpop.f32.mrb[0].mxu0
        %725 = vmatprep.mubr.f32.mxu0 0.0
        %726 = vmatmul.mubr.f32.gmra.mrb[0].mxu0 %v609
        %v727 = vpop.f32.mrb[0].mxu0
        %v728 = vadd.f32 0.0, %v727
        %v729 = vpop.f32.mrb[0].mxu0
        %730 = vmatprep.mubr.f32.mxu0 0.0
        %731 = vmatmul.mubr.f32.gmra.mrb[0].mxu0 %v610
        %v732 = vpop.f32.mrb[0].mxu0
        %v733 = vadd.f32 0.0, %v732
        %v734 = vpop.f32.mrb[0].mxu0
        %735 = vmatprep.mubr.f32.mxu0 0.0
        %736 = vmatmul.mubr.f32.gmra.mrb[0].mxu0 %v611
        %v737 = vpop.f32.mrb[0].mxu0
        %v738 = vadd.f32 0.0, %v737
        %v739 = vpop.f32.mrb[0].mxu0
        %740 = vmatprep.mubr.f32.mxu0 0.0
        %741 = vmatmul.mubr.f32.gmra.mrb[0].mxu0 %v612
        %v742 = vpop.f32.mrb[0].mxu0
        %v743 = vadd.f32 0.0, %v742
        %v744 = vpop.f32.mrb[0].mxu0
        %745 = vmatprep.mubr.f32.mxu0 0.0
        %746 = vmatmul.mubr.f32.gmra.mrb[0].mxu0 %v613
        %v747 = vpop.f32.mrb[0].mxu0
        %v748 = vadd.f32 0.0, %v747
        %v749 = vpop.f32.mrb[0].mxu0
        %750 = vmatprep.mubr.f32.mxu0 0.0
        %751 = vmatmul.mubr.f32.gmra.mrb[0].mxu0 %v614
        %v752 = vpop.f32.mrb[0].mxu0
        %v753 = vadd.f32 0.0, %v752
        %v754 = vpop.f32.mrb[0].mxu0
        %755 = vmatprep.mubr.f32.mxu0 0.0
        %756 = vmatmul.mubr.f32.gmra.mrb[0].mxu0 %v615
        %v757 = vpop.f32.mrb[0].mxu0
        %v758 = vadd.f32 0.0, %v757
        %v759 = vpop.f32.mrb[0].mxu0
        %760 = vdwg.mxu0
        %v761 = vadd.f32 %v584, %v683
        %v762 = vadd.f32 %v585, %v688
        %v763 = vadd.f32 %v586, %v693
        %v764 = vadd.f32 %v587, %v698
        %v765 = vadd.f32 %v588, %v703
        %v766 = vadd.f32 %v589, %v708
        %v767 = vadd.f32 %v590, %v713
        %v768 = vadd.f32 %v591, %v718
        %v769 = vadd.f32 %v592, %v723
        %v770 = vadd.f32 %v593, %v728
        %v771 = vadd.f32 %v594, %v733
        %v772 = vadd.f32 %v595, %v738
        %v773 = vadd.f32 %v596, %v743
        %v774 = vadd.f32 %v597, %v748
        %v775 = vadd.f32 %v598, %v753
        %v776 = vadd.f32 %v599, %v758
        %777 = vst [vmem:[#allocation3] sm:$0xff] %v761
        %778 = vst [vmem:[#allocation3 + $0x8] sm:$0xff] %v762
        %779 = vst [vmem:[#allocation3 + $0x10] sm:$0xff] %v763
        %780 = vst [vmem:[#allocation3 + $0x18] sm:$0xff] %v764
        %781 = vst [vmem:[#allocation3 + $0x20] sm:$0xff] %v765
        %782 = vst [vmem:[#allocation3 + $0x28] sm:$0xff] %v766
        %783 = vst [vmem:[#allocation3 + $0x30] sm:$0xff] %v767
        %784 = vst [vmem:[#allocation3 + $0x38] sm:$0xff] %v768
        %785 = vst [vmem:[#allocation3 + $0x40] sm:$0xff] %v769
        %786 = vst [vmem:[#allocation3 + $0x48] sm:$0xff] %v770
        %787 = vst [vmem:[#allocation3 + $0x50] sm:$0xff] %v771
        %788 = vst [vmem:[#allocation3 + $0x58] sm:$0xff] %v772
        %789 = vst [vmem:[#allocation3 + $0x60] sm:$0xff] %v773
        %790 = vst [vmem:[#allocation3 + $0x68] sm:$0xff] %v774
        %791 = vst [vmem:[#allocation3 + $0x70] sm:$0xff] %v775
        %792 = vst [vmem:[#allocation3 + $0x78] sm:$0xff] %v776
        %p793 = scmp.eq.s32.totalorder %s37, 1
        // Predicated region
        $region97: #{tpu_custom_call.1} parent=59 // pred_check
          %p794 = pneg %p793
        $region98: #{tpu_custom_call.1} parent=59 // pred_check_branch
          %796 = sbr.rel (%p794) target = $region100
        $region99: #{tpu_custom_call.1} parent=59 // pred_region
          %s797 = sadd.s32 %s486, %s565
          %s798 = scalar_lea.vmem [#allocation2], %s797
          %v799 = vld [vmem:[%s798] sm:$0xff]
          %v800 = vld [vmem:[%s798 + $0x8] sm:$0xff]
          %v801 = vld [vmem:[%s798 + $0x10] sm:$0xff]
          %v802 = vld [vmem:[%s798 + $0x18] sm:$0xff]
          %v803 = vld [vmem:[%s798 + $0x20] sm:$0xff]
          %v804 = vld [vmem:[%s798 + $0x28] sm:$0xff]
          %v805 = vld [vmem:[%s798 + $0x30] sm:$0xff]
          %v806 = vld [vmem:[%s798 + $0x38] sm:$0xff]
          %v807 = vld [vmem:[%s798 + $0x40] sm:$0xff]
          %v808 = vld [vmem:[%s798 + $0x48] sm:$0xff]
          %v809 = vld [vmem:[%s798 + $0x50] sm:$0xff]
          %v810 = vld [vmem:[%s798 + $0x58] sm:$0xff]
          %v811 = vld [vmem:[%s798 + $0x60] sm:$0xff]
          %v812 = vld [vmem:[%s798 + $0x68] sm:$0xff]
          %v813 = vld [vmem:[%s798 + $0x70] sm:$0xff]
          %v814 = vld [vmem:[%s798 + $0x78] sm:$0xff]
          %v815 = vld [vmem:[#allocation3] sm:$0xff]
          %v816 = vld [vmem:[#allocation3 + $0x8] sm:$0xff]
          %v817 = vld [vmem:[#allocation3 + $0x10] sm:$0xff]
          %v818 = vld [vmem:[#allocation3 + $0x18] sm:$0xff]
          %v819 = vld [vmem:[#allocation3 + $0x20] sm:$0xff]
          %v820 = vld [vmem:[#allocation3 + $0x28] sm:$0xff]
          %v821 = vld [vmem:[#allocation3 + $0x30] sm:$0xff]
          %v822 = vld [vmem:[#allocation3 + $0x38] sm:$0xff]
          %v823 = vld [vmem:[#allocation3 + $0x40] sm:$0xff]
          %v824 = vld [vmem:[#allocation3 + $0x48] sm:$0xff]
          %v825 = vld [vmem:[#allocation3 + $0x50] sm:$0xff]
          %v826 = vld [vmem:[#allocation3 + $0x58] sm:$0xff]
          %v827 = vld [vmem:[#allocation3 + $0x60] sm:$0xff]
          %v828 = vld [vmem:[#allocation3 + $0x68] sm:$0xff]
          %v829 = vld [vmem:[#allocation3 + $0x70] sm:$0xff]
          %v830 = vld [vmem:[#allocation3 + $0x78] sm:$0xff]
          %s831 = scalar_lea.vmem %s3, %s35
          %v832 = vld [vmem:[%s831] sm:$0x1]
          %v834 = vlaneseq
          %v835 = vshrl.u32 %v834, 7
          %v836 = vsub.s32 0, %v835
          %v837 = vrot.slane %v832, %v836
          %v839 = vmul.f32 %v837, %v799
          %v840 = vmul.f32 %v837, %v800
          %v841 = vmul.f32 %v837, %v801
          %v842 = vmul.f32 %v837, %v802
          %v843 = vmul.f32 %v837, %v803
          %v844 = vmul.f32 %v837, %v804
          %v845 = vmul.f32 %v837, %v805
          %v846 = vmul.f32 %v837, %v806
          %v847 = vmul.f32 %v837, %v807
          %v848 = vmul.f32 %v837, %v808
          %v849 = vmul.f32 %v837, %v809
          %v850 = vmul.f32 %v837, %v810
          %v851 = vmul.f32 %v837, %v811
          %v852 = vmul.f32 %v837, %v812
          %v853 = vmul.f32 %v837, %v813
          %v854 = vmul.f32 %v837, %v814
          %v855 = vadd.f32 %v815, %v839
          %v856 = vadd.f32 %v816, %v840
          %v857 = vadd.f32 %v817, %v841
          %v858 = vadd.f32 %v818, %v842
          %v859 = vadd.f32 %v819, %v843
          %v860 = vadd.f32 %v820, %v844
          %v861 = vadd.f32 %v821, %v845
          %v862 = vadd.f32 %v822, %v846
          %v863 = vadd.f32 %v823, %v847
          %v864 = vadd.f32 %v824, %v848
          %v865 = vadd.f32 %v825, %v849
          %v866 = vadd.f32 %v826, %v850
          %v867 = vadd.f32 %v827, %v851
          %v868 = vadd.f32 %v828, %v852
          %v869 = vadd.f32 %v829, %v853
          %v870 = vadd.f32 %v830, %v854
          %s871 = smul.u32 %s35, 128
          %s872 = scalar_lea.vmem [#allocation11], %s871
          %v873 = vld [vmem:[%s872] sm:$0xff]
          %v874 = vld [vmem:[%s872 + $0x8] sm:$0xff]
          %v875 = vld [vmem:[%s872 + $0x10] sm:$0xff]
          %v876 = vld [vmem:[%s872 + $0x18] sm:$0xff]
          %v877 = vld [vmem:[%s872 + $0x20] sm:$0xff]
          %v878 = vld [vmem:[%s872 + $0x28] sm:$0xff]
          %v879 = vld [vmem:[%s872 + $0x30] sm:$0xff]
          %v880 = vld [vmem:[%s872 + $0x38] sm:$0xff]
          %v881 = vld [vmem:[%s872 + $0x40] sm:$0xff]
          %v882 = vld [vmem:[%s872 + $0x48] sm:$0xff]
          %v883 = vld [vmem:[%s872 + $0x50] sm:$0xff]
          %v884 = vld [vmem:[%s872 + $0x58] sm:$0xff]
          %v885 = vld [vmem:[%s872 + $0x60] sm:$0xff]
          %v886 = vld [vmem:[%s872 + $0x68] sm:$0xff]
          %v887 = vld [vmem:[%s872 + $0x70] sm:$0xff]
          %v888 = vld [vmem:[%s872 + $0x78] sm:$0xff]
          %s889 = scalar_lea.vmem %s5, %s35
          %v890 = vld [vmem:[%s889] sm:$0x1]
          %v892 = vlaneseq
          %v893 = vshrl.u32 %v892, 7
          %v894 = vsub.s32 0, %v893
          %v895 = vrot.slane %v890, %v894
          %897 = vmatprep.subr.mxu0 0.0
          %898 = vmatpush1.msra.mxu0 %v873
          %899 = vmatprep.subr.mxu0 0.0
          %900 = vmatpush1.msra.mxu0 %v874
          %901 = vmatprep.subr.mxu0 0.0
          %902 = vmatpush1.msra.mxu0 %v875
          %903 = vmatprep.subr.mxu0 0.0
          %904 = vmatpush1.msra.mxu0 %v876
          %905 = vmatprep.subr.mxu0 0.0
          %906 = vmatpush1.msra.mxu0 %v877
          %907 = vmatprep.subr.mxu0 0.0
          %908 = vmatpush1.msra.mxu0 %v878
          %909 = vmatprep.subr.mxu0 0.0
          %910 = vmatpush1.msra.mxu0 %v879
          %911 = vmatprep.subr.mxu0 0.0
          %912 = vmatpush1.msra.mxu0 %v880
          %913 = vmatprep.subr.mxu0 0.0
          %914 = vmatpush1.msra.mxu0 %v881
          %915 = vmatprep.subr.mxu0 0.0
          %916 = vmatpush1.msra.mxu0 %v882
          %917 = vmatprep.subr.mxu0 0.0
          %918 = vmatpush1.msra.mxu0 %v883
          %919 = vmatprep.subr.mxu0 0.0
          %920 = vmatpush1.msra.mxu0 %v884
          %921 = vmatprep.subr.mxu0 0.0
          %922 = vmatpush1.msra.mxu0 %v885
          %923 = vmatprep.subr.mxu0 0.0
          %924 = vmatpush1.msra.mxu0 %v886
          %925 = vmatprep.subr.mxu0 0.0
          %926 = vmatpush1.msra.mxu0 %v887
          %927 = vmatprep.subr.mxu0 0.0
          %928 = vmatpush1.msra.mxu0 %v888
          %929 = vmatprep.subr.mxu0 0.0
          %930 = vmatpush1.msra.mxu0 0.0
          %931 = vmatprep.subr.mxu0 0.0
          %932 = vmatpush1.msra.mxu0 0.0
          %933 = vmatprep.subr.mxu0 0.0
          %934 = vmatpush1.msra.mxu0 0.0
          %935 = vmatprep.subr.mxu0 0.0
          %936 = vmatpush1.msra.mxu0 0.0
          %937 = vmatprep.subr.mxu0 0.0
          %938 = vmatpush1.msra.mxu0 0.0
          %939 = vmatprep.subr.mxu0 0.0
          %940 = vmatpush1.msra.mxu0 0.0
          %941 = vmatprep.subr.mxu0 0.0
          %942 = vmatpush1.msra.mxu0 0.0
          %943 = vmatprep.subr.mxu0 0.0
          %944 = vmatpush1.msra.mxu0 0.0
          %945 = vmatprep.subr.mxu0 0.0
          %946 = vmatpush1.msra.mxu0 0.0
          %947 = vmatprep.subr.mxu0 0.0
          %948 = vmatpush1.msra.mxu0 0.0
          %949 = vmatprep.subr.mxu0 0.0
          %950 = vmatpush1.msra.mxu0 0.0
          %951 = vmatprep.subr.mxu0 0.0
          %952 = vmatpush1.msra.mxu0 0.0
          %953 = vmatprep.subr.mxu0 0.0
          %954 = vmatpush1.msra.mxu0 0.0
          %955 = vmatprep.subr.mxu0 0.0
          %956 = vmatpush1.msra.mxu0 0.0
          %957 = vmatprep.subr.mxu0 0.0
          %958 = vmatpush1.msra.mxu0 0.0
          %959 = vmatprep.subr.mxu0 0.0
          %960 = vmatpush1.msra.mxu0 0.0
          %961 = vmatprep.mubr.f32.mxu0 0.0
          %962 = vmatmul.mubr.f32.gmra.mrb[0].mxu0 %v855
          %v963 = vpop.f32.mrb[0].mxu0
          %v964 = vadd.f32 %v895, %v963
          %v965 = vpop.f32.mrb[0].mxu0
          %966 = vmatprep.mubr.f32.mxu0 0.0
          %967 = vmatmul.mubr.f32.gmra.mrb[0].mxu0 %v856
          %v968 = vpop.f32.mrb[0].mxu0
          %v969 = vadd.f32 %v895, %v968
          %v970 = vpop.f32.mrb[0].mxu0
          %971 = vmatprep.mubr.f32.mxu0 0.0
          %972 = vmatmul.mubr.f32.gmra.mrb[0].mxu0 %v857
          %v973 = vpop.f32.mrb[0].mxu0
          %v974 = vadd.f32 %v895, %v973
          %v975 = vpop.f32.mrb[0].mxu0
          %976 = vmatprep.mubr.f32.mxu0 0.0
          %977 = vmatmul.mubr.f32.gmra.mrb[0].mxu0 %v858
          %v978 = vpop.f32.mrb[0].mxu0
          %v979 = vadd.f32 %v895, %v978
          %v980 = vpop.f32.mrb[0].mxu0
          %981 = vmatprep.mubr.f32.mxu0 0.0
          %982 = vmatmul.mubr.f32.gmra.mrb[0].mxu0 %v859
          %v983 = vpop.f32.mrb[0].mxu0
          %v984 = vadd.f32 %v895, %v983
          %v985 = vpop.f32.mrb[0].mxu0
          %986 = vmatprep.mubr.f32.mxu0 0.0
          %987 = vmatmul.mubr.f32.gmra.mrb[0].mxu0 %v860
          %v988 = vpop.f32.mrb[0].mxu0
          %v989 = vadd.f32 %v895, %v988
          %v990 = vpop.f32.mrb[0].mxu0
          %991 = vmatprep.mubr.f32.mxu0 0.0
          %992 = vmatmul.mubr.f32.gmra.mrb[0].mxu0 %v861
          %v993 = vpop.f32.mrb[0].mxu0
          %v994 = vadd.f32 %v895, %v993
          %v995 = vpop.f32.mrb[0].mxu0
          %996 = vmatprep.mubr.f32.mxu0 0.0
          %997 = vmatmul.mubr.f32.gmra.mrb[0].mxu0 %v862
          %v998 = vpop.f32.mrb[0].mxu0
          %v999 = vadd.f32 %v895, %v998
          %v1000 = vpop.f32.mrb[0].mxu0
          %1001 = vmatprep.mubr.f32.mxu0 0.0
          %1002 = vmatmul.mubr.f32.gmra.mrb[0].mxu0 %v863
          %v1003 = vpop.f32.mrb[0].mxu0
          %v1004 = vadd.f32 %v895, %v1003
          %v1005 = vpop.f32.mrb[0].mxu0
          %1006 = vmatprep.mubr.f32.mxu0 0.0
          %1007 = vmatmul.mubr.f32.gmra.mrb[0].mxu0 %v864
          %v1008 = vpop.f32.mrb[0].mxu0
          %v1009 = vadd.f32 %v895, %v1008
          %v1010 = vpop.f32.mrb[0].mxu0
          %1011 = vmatprep.mubr.f32.mxu0 0.0
          %1012 = vmatmul.mubr.f32.gmra.mrb[0].mxu0 %v865
          %v1013 = vpop.f32.mrb[0].mxu0
          %v1014 = vadd.f32 %v895, %v1013
          %v1015 = vpop.f32.mrb[0].mxu0
          %1016 = vmatprep.mubr.f32.mxu0 0.0
          %1017 = vmatmul.mubr.f32.gmra.mrb[0].mxu0 %v866
          %v1018 = vpop.f32.mrb[0].mxu0
          %v1019 = vadd.f32 %v895, %v1018
          %v1020 = vpop.f32.mrb[0].mxu0
          %1021 = vmatprep.mubr.f32.mxu0 0.0
          %1022 = vmatmul.mubr.f32.gmra.mrb[0].mxu0 %v867
          %v1023 = vpop.f32.mrb[0].mxu0
          %v1024 = vadd.f32 %v895, %v1023
          %v1025 = vpop.f32.mrb[0].mxu0
          %1026 = vmatprep.mubr.f32.mxu0 0.0
          %1027 = vmatmul.mubr.f32.gmra.mrb[0].mxu0 %v868
          %v1028 = vpop.f32.mrb[0].mxu0
          %v1029 = vadd.f32 %v895, %v1028
          %v1030 = vpop.f32.mrb[0].mxu0
          %1031 = vmatprep.mubr.f32.mxu0 0.0
          %1032 = vmatmul.mubr.f32.gmra.mrb[0].mxu0 %v869
          %v1033 = vpop.f32.mrb[0].mxu0
          %v1034 = vadd.f32 %v895, %v1033
          %v1035 = vpop.f32.mrb[0].mxu0
          %1036 = vmatprep.mubr.f32.mxu0 0.0
          %1037 = vmatmul.mubr.f32.gmra.mrb[0].mxu0 %v870
          %v1038 = vpop.f32.mrb[0].mxu0
          %v1039 = vadd.f32 %v895, %v1038
          %v1040 = vpop.f32.mrb[0].mxu0
          %1041 = vdwg.mxu0
          %v1042 = vmax.f32 %v964, 0.0
          %v1043 = vmax.f32 %v969, 0.0
          %v1044 = vmax.f32 %v974, 0.0
          %v1045 = vmax.f32 %v979, 0.0
          %v1046 = vmax.f32 %v984, 0.0
          %v1047 = vmax.f32 %v989, 0.0
          %v1048 = vmax.f32 %v994, 0.0
          %v1049 = vmax.f32 %v999, 0.0
          %v1050 = vmax.f32 %v1004, 0.0
          %v1051 = vmax.f32 %v1009, 0.0
          %v1052 = vmax.f32 %v1014, 0.0
          %v1053 = vmax.f32 %v1019, 0.0
          %v1054 = vmax.f32 %v1024, 0.0
          %v1055 = vmax.f32 %v1029, 0.0
          %v1056 = vmax.f32 %v1034, 0.0
          %v1057 = vmax.f32 %v1039, 0.0
          %s1058 = scalar_lea.vmem [#allocation13], %s871
          %v1059 = vld [vmem:[%s1058] sm:$0xff]
          %v1060 = vld [vmem:[%s1058 + $0x8] sm:$0xff]
          %v1061 = vld [vmem:[%s1058 + $0x10] sm:$0xff]
          %v1062 = vld [vmem:[%s1058 + $0x18] sm:$0xff]
          %v1063 = vld [vmem:[%s1058 + $0x20] sm:$0xff]
          %v1064 = vld [vmem:[%s1058 + $0x28] sm:$0xff]
          %v1065 = vld [vmem:[%s1058 + $0x30] sm:$0xff]
          %v1066 = vld [vmem:[%s1058 + $0x38] sm:$0xff]
          %v1067 = vld [vmem:[%s1058 + $0x40] sm:$0xff]
          %v1068 = vld [vmem:[%s1058 + $0x48] sm:$0xff]
          %v1069 = vld [vmem:[%s1058 + $0x50] sm:$0xff]
          %v1070 = vld [vmem:[%s1058 + $0x58] sm:$0xff]
          %v1071 = vld [vmem:[%s1058 + $0x60] sm:$0xff]
          %v1072 = vld [vmem:[%s1058 + $0x68] sm:$0xff]
          %v1073 = vld [vmem:[%s1058 + $0x70] sm:$0xff]
          %v1074 = vld [vmem:[%s1058 + $0x78] sm:$0xff]
          %s1075 = scalar_lea.vmem %s7, %s35
          %v1076 = vld [vmem:[%s1075] sm:$0x1]
          %v1078 = vlaneseq
          %v1079 = vshrl.u32 %v1078, 7
          %v1080 = vsub.s32 0, %v1079
          %v1081 = vrot.slane %v1076, %v1080
          %1083 = vmatprep.subr.mxu0 0.0
          %1084 = vmatpush1.msra.mxu0 %v1059
          %1085 = vmatprep.subr.mxu0 0.0
          %1086 = vmatpush1.msra.mxu0 %v1060
          %1087 = vmatprep.subr.mxu0 0.0
          %1088 = vmatpush1.msra.mxu0 %v1061
          %1089 = vmatprep.subr.mxu0 0.0
          %1090 = vmatpush1.msra.mxu0 %v1062
          %1091 = vmatprep.subr.mxu0 0.0
          %1092 = vmatpush1.msra.mxu0 %v1063
          %1093 = vmatprep.subr.mxu0 0.0
          %1094 = vmatpush1.msra.mxu0 %v1064
          %1095 = vmatprep.subr.mxu0 0.0
          %1096 = vmatpush1.msra.mxu0 %v1065
          %1097 = vmatprep.subr.mxu0 0.0
          %1098 = vmatpush1.msra.mxu0 %v1066
          %1099 = vmatprep.subr.mxu0 0.0
          %1100 = vmatpush1.msra.mxu0 %v1067
          %1101 = vmatprep.subr.mxu0 0.0
          %1102 = vmatpush1.msra.mxu0 %v1068
          %1103 = vmatprep.subr.mxu0 0.0
          %1104 = vmatpush1.msra.mxu0 %v1069
          %1105 = vmatprep.subr.mxu0 0.0
          %1106 = vmatpush1.msra.mxu0 %v1070
          %1107 = vmatprep.subr.mxu0 0.0
          %1108 = vmatpush1.msra.mxu0 %v1071
          %1109 = vmatprep.subr.mxu0 0.0
          %1110 = vmatpush1.msra.mxu0 %v1072
          %1111 = vmatprep.subr.mxu0 0.0
          %1112 = vmatpush1.msra.mxu0 %v1073
          %1113 = vmatprep.subr.mxu0 0.0
          %1114 = vmatpush1.msra.mxu0 %v1074
          %1115 = vmatprep.subr.mxu0 0.0
          %1116 = vmatpush1.msra.mxu0 0.0
          %1117 = vmatprep.subr.mxu0 0.0
          %1118 = vmatpush1.msra.mxu0 0.0
          %1119 = vmatprep.subr.mxu0 0.0
          %1120 = vmatpush1.msra.mxu0 0.0
          %1121 = vmatprep.subr.mxu0 0.0
          %1122 = vmatpush1.msra.mxu0 0.0
          %1123 = vmatprep.subr.mxu0 0.0
          %1124 = vmatpush1.msra.mxu0 0.0
          %1125 = vmatprep.subr.mxu0 0.0
          %1126 = vmatpush1.msra.mxu0 0.0
          %1127 = vmatprep.subr.mxu0 0.0
          %1128 = vmatpush1.msra.mxu0 0.0
          %1129 = vmatprep.subr.mxu0 0.0
          %1130 = vmatpush1.msra.mxu0 0.0
          %1131 = vmatprep.subr.mxu0 0.0
          %1132 = vmatpush1.msra.mxu0 0.0
          %1133 = vmatprep.subr.mxu0 0.0
          %1134 = vmatpush1.msra.mxu0 0.0
          %1135 = vmatprep.subr.mxu0 0.0
          %1136 = vmatpush1.msra.mxu0 0.0
          %1137 = vmatprep.subr.mxu0 0.0
          %1138 = vmatpush1.msra.mxu0 0.0
          %1139 = vmatprep.subr.mxu0 0.0
          %1140 = vmatpush1.msra.mxu0 0.0
          %1141 = vmatprep.subr.mxu0 0.0
          %1142 = vmatpush1.msra.mxu0 0.0
          %1143 = vmatprep.subr.mxu0 0.0
          %1144 = vmatpush1.msra.mxu0 0.0
          %1145 = vmatprep.subr.mxu0 0.0
          %1146 = vmatpush1.msra.mxu0 0.0
          %1147 = vmatprep.mubr.f32.mxu0 0.0
          %1148 = vmatmul.mubr.f32.gmra.mrb[0].mxu0 %v1042
          %v1149 = vpop.f32.mrb[0].mxu0
          %v1150 = vadd.f32 %v1081, %v1149
          %v1151 = vpop.f32.mrb[0].mxu0
          %1152 = vmatprep.mubr.f32.mxu0 0.0
          %1153 = vmatmul.mubr.f32.gmra.mrb[0].mxu0 %v1043
          %v1154 = vpop.f32.mrb[0].mxu0
          %v1155 = vadd.f32 %v1081, %v1154
          %v1156 = vpop.f32.mrb[0].mxu0
          %1157 = vmatprep.mubr.f32.mxu0 0.0
          %1158 = vmatmul.mubr.f32.gmra.mrb[0].mxu0 %v1044
          %v1159 = vpop.f32.mrb[0].mxu0
          %v1160 = vadd.f32 %v1081, %v1159
          %v1161 = vpop.f32.mrb[0].mxu0
          %1162 = vmatprep.mubr.f32.mxu0 0.0
          %1163 = vmatmul.mubr.f32.gmra.mrb[0].mxu0 %v1045
          %v1164 = vpop.f32.mrb[0].mxu0
          %v1165 = vadd.f32 %v1081, %v1164
          %v1166 = vpop.f32.mrb[0].mxu0
          %1167 = vmatprep.mubr.f32.mxu0 0.0
          %1168 = vmatmul.mubr.f32.gmra.mrb[0].mxu0 %v1046
          %v1169 = vpop.f32.mrb[0].mxu0
          %v1170 = vadd.f32 %v1081, %v1169
          %v1171 = vpop.f32.mrb[0].mxu0
          %1172 = vmatprep.mubr.f32.mxu0 0.0
          %1173 = vmatmul.mubr.f32.gmra.mrb[0].mxu0 %v1047
          %v1174 = vpop.f32.mrb[0].mxu0
          %v1175 = vadd.f32 %v1081, %v1174
          %v1176 = vpop.f32.mrb[0].mxu0
          %1177 = vmatprep.mubr.f32.mxu0 0.0
          %1178 = vmatmul.mubr.f32.gmra.mrb[0].mxu0 %v1048
          %v1179 = vpop.f32.mrb[0].mxu0
          %v1180 = vadd.f32 %v1081, %v1179
          %v1181 = vpop.f32.mrb[0].mxu0
          %1182 = vmatprep.mubr.f32.mxu0 0.0
          %1183 = vmatmul.mubr.f32.gmra.mrb[0].mxu0 %v1049
          %v1184 = vpop.f32.mrb[0].mxu0
          %v1185 = vadd.f32 %v1081, %v1184
          %v1186 = vpop.f32.mrb[0].mxu0
          %1187 = vmatprep.mubr.f32.mxu0 0.0
          %1188 = vmatmul.mubr.f32.gmra.mrb[0].mxu0 %v1050
          %v1189 = vpop.f32.mrb[0].mxu0
          %v1190 = vadd.f32 %v1081, %v1189
          %v1191 = vpop.f32.mrb[0].mxu0
          %1192 = vmatprep.mubr.f32.mxu0 0.0
          %1193 = vmatmul.mubr.f32.gmra.mrb[0].mxu0 %v1051
          %v1194 = vpop.f32.mrb[0].mxu0
          %v1195 = vadd.f32 %v1081, %v1194
          %v1196 = vpop.f32.mrb[0].mxu0
          %1197 = vmatprep.mubr.f32.mxu0 0.0
          %1198 = vmatmul.mubr.f32.gmra.mrb[0].mxu0 %v1052
          %v1199 = vpop.f32.mrb[0].mxu0
          %v1200 = vadd.f32 %v1081, %v1199
          %v1201 = vpop.f32.mrb[0].mxu0
          %1202 = vmatprep.mubr.f32.mxu0 0.0
          %1203 = vmatmul.mubr.f32.gmra.mrb[0].mxu0 %v1053
          %v1204 = vpop.f32.mrb[0].mxu0
          %v1205 = vadd.f32 %v1081, %v1204
          %v1206 = vpop.f32.mrb[0].mxu0
          %1207 = vmatprep.mubr.f32.mxu0 0.0
          %1208 = vmatmul.mubr.f32.gmra.mrb[0].mxu0 %v1054
          %v1209 = vpop.f32.mrb[0].mxu0
          %v1210 = vadd.f32 %v1081, %v1209
          %v1211 = vpop.f32.mrb[0].mxu0
          %1212 = vmatprep.mubr.f32.mxu0 0.0
          %1213 = vmatmul.mubr.f32.gmra.mrb[0].mxu0 %v1055
          %v1214 = vpop.f32.mrb[0].mxu0
          %v1215 = vadd.f32 %v1081, %v1214
          %v1216 = vpop.f32.mrb[0].mxu0
          %1217 = vmatprep.mubr.f32.mxu0 0.0
          %1218 = vmatmul.mubr.f32.gmra.mrb[0].mxu0 %v1056
          %v1219 = vpop.f32.mrb[0].mxu0
          %v1220 = vadd.f32 %v1081, %v1219
          %v1221 = vpop.f32.mrb[0].mxu0
          %1222 = vmatprep.mubr.f32.mxu0 0.0
          %1223 = vmatmul.mubr.f32.gmra.mrb[0].mxu0 %v1057
          %v1224 = vpop.f32.mrb[0].mxu0
          %v1225 = vadd.f32 %v1081, %v1224
          %v1226 = vpop.f32.mrb[0].mxu0
          %1227 = vdwg.mxu0
          %v1228 = vmax.f32 %v1150, 0.0
          %v1229 = vmax.f32 %v1155, 0.0
          %v1230 = vmax.f32 %v1160, 0.0
          %v1231 = vmax.f32 %v1165, 0.0
          %v1232 = vmax.f32 %v1170, 0.0
          %v1233 = vmax.f32 %v1175, 0.0
          %v1234 = vmax.f32 %v1180, 0.0
          %v1235 = vmax.f32 %v1185, 0.0
          %v1236 = vmax.f32 %v1190, 0.0
          %v1237 = vmax.f32 %v1195, 0.0
          %v1238 = vmax.f32 %v1200, 0.0
          %v1239 = vmax.f32 %v1205, 0.0
          %v1240 = vmax.f32 %v1210, 0.0
          %v1241 = vmax.f32 %v1215, 0.0
          %v1242 = vmax.f32 %v1220, 0.0
          %v1243 = vmax.f32 %v1225, 0.0
          %s1244 = smul.u32 %s499, 256
          %s1245 = sadd.s32 %s486, %s1244
          %s1246 = scalar_lea.vmem [#allocation2], %s1245
          %1247 = vst [vmem:[%s1246] sm:$0xff] %v1228
          %1248 = vst [vmem:[%s1246 + $0x8] sm:$0xff] %v1229
          %1249 = vst [vmem:[%s1246 + $0x10] sm:$0xff] %v1230
          %1250 = vst [vmem:[%s1246 + $0x18] sm:$0xff] %v1231
          %1251 = vst [vmem:[%s1246 + $0x20] sm:$0xff] %v1232
          %1252 = vst [vmem:[%s1246 + $0x28] sm:$0xff] %v1233
          %1253 = vst [vmem:[%s1246 + $0x30] sm:$0xff] %v1234
          %1254 = vst [vmem:[%s1246 + $0x38] sm:$0xff] %v1235
          %1255 = vst [vmem:[%s1246 + $0x40] sm:$0xff] %v1236
          %1256 = vst [vmem:[%s1246 + $0x48] sm:$0xff] %v1237
          %1257 = vst [vmem:[%s1246 + $0x50] sm:$0xff] %v1238
          %1258 = vst [vmem:[%s1246 + $0x58] sm:$0xff] %v1239
          %1259 = vst [vmem:[%s1246 + $0x60] sm:$0xff] %v1240
          %1260 = vst [vmem:[%s1246 + $0x68] sm:$0xff] %v1241
          %1261 = vst [vmem:[%s1246 + $0x70] sm:$0xff] %v1242
          %1262 = vst [vmem:[%s1246 + $0x78] sm:$0xff] %v1243
          %v1263 = vld [vmem:[%s431] sm:$0x3]
          // Predicated region
          $region101: #{tpu_custom_call.1} parent=99 // pred_check
            %p1264 = pneg %p500
          $region102: #{tpu_custom_call.1} parent=99 // pred_check_branch
            %1266 = sbr.rel (%p1264) target = $region104
          $region103: #{tpu_custom_call.1} parent=99 // pred_region
            %1267 = vmatprep.subr.mxu0 0.0
            %1268 = vmatpush1.msra.mxu0 %v799
            %1269 = vmatprep.subr.mxu0 0.0
            %1270 = vmatpush1.msra.mxu0 %v800
            %1271 = vmatprep.subr.mxu0 0.0
            %1272 = vmatpush1.msra.mxu0 %v801
            %1273 = vmatprep.subr.mxu0 0.0
            %1274 = vmatpush1.msra.mxu0 %v802
            %1275 = vmatprep.subr.mxu0 0.0
            %1276 = vmatpush1.msra.mxu0 %v803
            %1277 = vmatprep.subr.mxu0 0.0
            %1278 = vmatpush1.msra.mxu0 %v804
            %1279 = vmatprep.subr.mxu0 0.0
            %1280 = vmatpush1.msra.mxu0 %v805
            %1281 = vmatprep.subr.mxu0 0.0
            %1282 = vmatpush1.msra.mxu0 %v806
            %1283 = vmatprep.subr.mxu0 0.0
            %1284 = vmatpush1.msra.mxu0 %v807
            %1285 = vmatprep.subr.mxu0 0.0
            %1286 = vmatpush1.msra.mxu0 %v808
            %1287 = vmatprep.subr.mxu0 0.0
            %1288 = vmatpush1.msra.mxu0 %v809
            %1289 = vmatprep.subr.mxu0 0.0
            %1290 = vmatpush1.msra.mxu0 %v810
            %1291 = vmatprep.subr.mxu0 0.0
            %1292 = vmatpush1.msra.mxu0 %v811
            %1293 = vmatprep.subr.mxu0 0.0
            %1294 = vmatpush1.msra.mxu0 %v812
            %1295 = vmatprep.subr.mxu0 0.0
            %1296 = vmatpush1.msra.mxu0 %v813
            %1297 = vmatprep.subr.mxu0 0.0
            %1298 = vmatpush1.msra.mxu0 %v814
            %1299 = vmatprep.subr.mxu0 0.0
            %1300 = vmatpush1.msra.mxu0 0.0
            %1301 = vmatprep.subr.mxu0 0.0
            %1302 = vmatpush1.msra.mxu0 0.0
            %1303 = vmatprep.subr.mxu0 0.0
            %1304 = vmatpush1.msra.mxu0 0.0
            %1305 = vmatprep.subr.mxu0 0.0
            %1306 = vmatpush1.msra.mxu0 0.0
            %1307 = vmatprep.subr.mxu0 0.0
            %1308 = vmatpush1.msra.mxu0 0.0
            %1309 = vmatprep.subr.mxu0 0.0
            %1310 = vmatpush1.msra.mxu0 0.0
            %1311 = vmatprep.subr.mxu0 0.0
            %1312 = vmatpush1.msra.mxu0 0.0
            %1313 = vmatprep.subr.mxu0 0.0
            %1314 = vmatpush1.msra.mxu0 0.0
            %1315 = vmatprep.subr.mxu0 0.0
            %1316 = vmatpush1.msra.mxu0 0.0
            %1317 = vmatprep.subr.mxu0 0.0
            %1318 = vmatpush1.msra.mxu0 0.0
            %1319 = vmatprep.subr.mxu0 0.0
            %1320 = vmatpush1.msra.mxu0 0.0
            %1321 = vmatprep.subr.mxu0 0.0
            %1322 = vmatpush1.msra.mxu0 0.0
            %1323 = vmatprep.subr.mxu0 0.0
            %1324 = vmatpush1.msra.mxu0 0.0
            %1325 = vmatprep.subr.mxu0 0.0
            %1326 = vmatpush1.msra.mxu0 0.0
            %1327 = vmatprep.subr.mxu0 0.0
            %1328 = vmatpush1.msra.mxu0 0.0
            %1329 = vmatprep.subr.mxu0 0.0
            %1330 = vmatpush1.msra.mxu0 0.0
            %1331 = vmatprep.mubr.f32.mxu0 0.0
            %1332 = vmatmul.mubr.f32.gmra.mrb[0].mxu0 %v1263
            %v1333 = vpop.f32.mrb[0].mxu0
            %v1334 = vadd.f32 0.0, %v1333
            %v1335 = vpop.f32.mrb[0].mxu0
            %1336 = vdwg.mxu0
            %v1337 = vld [vmem:[#allocation4] sm:$0x3]
            %v1338 = vld [vmem:[#allocation14] sm:$0xff]
            %v1339 = vld [vmem:[#allocation14 + $0x8] sm:$0xff]
            %v1340 = vld [vmem:[#allocation14 + $0x10] sm:$0xff]
            %v1341 = vld [vmem:[#allocation14 + $0x18] sm:$0xff]
            %v1342 = vld [vmem:[#allocation14 + $0x20] sm:$0xff]
            %v1343 = vld [vmem:[#allocation14 + $0x28] sm:$0xff]
            %v1344 = vld [vmem:[#allocation14 + $0x30] sm:$0xff]
            %v1345 = vld [vmem:[#allocation14 + $0x38] sm:$0xff]
            %v1346 = vld [vmem:[#allocation14 + $0x40] sm:$0xff]
            %v1347 = vld [vmem:[#allocation14 + $0x48] sm:$0xff]
            %v1348 = vld [vmem:[#allocation14 + $0x50] sm:$0xff]
            %v1349 = vld [vmem:[#allocation14 + $0x58] sm:$0xff]
            %v1350 = vld [vmem:[#allocation14 + $0x60] sm:$0xff]
            %v1351 = vld [vmem:[#allocation14 + $0x68] sm:$0xff]
            %v1352 = vld [vmem:[#allocation14 + $0x70] sm:$0xff]
            %v1353 = vld [vmem:[#allocation14 + $0x78] sm:$0xff]
            %1354 = vmatprep.subr.mxu0 0.0
            %1355 = vmatpush1.msra.mxu0 %v1338
            %1356 = vmatprep.subr.mxu0 0.0
            %1357 = vmatpush1.msra.mxu0 %v1339
            %1358 = vmatprep.subr.mxu0 0.0
            %1359 = vmatpush1.msra.mxu0 %v1340
            %1360 = vmatprep.subr.mxu0 0.0
            %1361 = vmatpush1.msra.mxu0 %v1341
            %1362 = vmatprep.subr.mxu0 0.0
            %1363 = vmatpush1.msra.mxu0 %v1342
            %1364 = vmatprep.subr.mxu0 0.0
            %1365 = vmatpush1.msra.mxu0 %v1343
            %1366 = vmatprep.subr.mxu0 0.0
            %1367 = vmatpush1.msra.mxu0 %v1344
            %1368 = vmatprep.subr.mxu0 0.0
            %1369 = vmatpush1.msra.mxu0 %v1345
            %1370 = vmatprep.subr.mxu0 0.0
            %1371 = vmatpush1.msra.mxu0 %v1346
            %1372 = vmatprep.subr.mxu0 0.0
            %1373 = vmatpush1.msra.mxu0 %v1347
            %1374 = vmatprep.subr.mxu0 0.0
            %1375 = vmatpush1.msra.mxu0 %v1348
            %1376 = vmatprep.subr.mxu0 0.0
            %1377 = vmatpush1.msra.mxu0 %v1349
            %1378 = vmatprep.subr.mxu0 0.0
            %1379 = vmatpush1.msra.mxu0 %v1350
            %1380 = vmatprep.subr.mxu0 0.0
            %1381 = vmatpush1.msra.mxu0 %v1351
            %1382 = vmatprep.subr.mxu0 0.0
            %1383 = vmatpush1.msra.mxu0 %v1352
            %1384 = vmatprep.subr.mxu0 0.0
            %1385 = vmatpush1.msra.mxu0 %v1353
            %1386 = vmatprep.subr.mxu0 0.0
            %1387 = vmatpush1.msra.mxu0 0.0
            %1388 = vmatprep.subr.mxu0 0.0
            %1389 = vmatpush1.msra.mxu0 0.0
            %1390 = vmatprep.subr.mxu0 0.0
            %1391 = vmatpush1.msra.mxu0 0.0
            %1392 = vmatprep.subr.mxu0 0.0
            %1393 = vmatpush1.msra.mxu0 0.0
            %1394 = vmatprep.subr.mxu0 0.0
            %1395 = vmatpush1.msra.mxu0 0.0
            %1396 = vmatprep.subr.mxu0 0.0
            %1397 = vmatpush1.msra.mxu0 0.0
            %1398 = vmatprep.subr.mxu0 0.0
            %1399 = vmatpush1.msra.mxu0 0.0
            %1400 = vmatprep.subr.mxu0 0.0
            %1401 = vmatpush1.msra.mxu0 0.0
            %1402 = vmatprep.subr.mxu0 0.0
            %1403 = vmatpush1.msra.mxu0 0.0
            %1404 = vmatprep.subr.mxu0 0.0
            %1405 = vmatpush1.msra.mxu0 0.0
            %1406 = vmatprep.subr.mxu0 0.0
            %1407 = vmatpush1.msra.mxu0 0.0
            %1408 = vmatprep.subr.mxu0 0.0
            %1409 = vmatpush1.msra.mxu0 0.0
            %1410 = vmatprep.subr.mxu0 0.0
            %1411 = vmatpush1.msra.mxu0 0.0
            %1412 = vmatprep.subr.mxu0 0.0
            %1413 = vmatpush1.msra.mxu0 0.0
            %1414 = vmatprep.subr.mxu0 0.0
            %1415 = vmatpush1.msra.mxu0 0.0
            %1416 = vmatprep.subr.mxu0 0.0
            %1417 = vmatpush1.msra.mxu0 0.0
            %1418 = vmatprep.mubr.f32.mxu0 0.0
            %1419 = vmatmul.mubr.f32.gmra.mrb[0].mxu0 %v1334
            %v1420 = vpop.f32.mrb[0].mxu0
            %v1421 = vadd.f32 0.0, %v1420
            %v1422 = vpop.f32.mrb[0].mxu0
            %1423 = vdwg.mxu0
            %v1424 = vadd.f32 %v1337, %v1421
            %1425 = vst [vmem:[#allocation4] sm:$0x3] %v1424
          $region104: #{tpu_custom_call.1} parent=99 // pred_fallthru
            _
          %1426 = vmatprep.subr.mxu0 0.0
          %1427 = vmatpush1.msra.mxu0 %v1228
          %1428 = vmatprep.subr.mxu0 0.0
          %1429 = vmatpush1.msra.mxu0 %v1229
          %1430 = vmatprep.subr.mxu0 0.0
          %1431 = vmatpush1.msra.mxu0 %v1230
          %1432 = vmatprep.subr.mxu0 0.0
          %1433 = vmatpush1.msra.mxu0 %v1231
          %1434 = vmatprep.subr.mxu0 0.0
          %1435 = vmatpush1.msra.mxu0 %v1232
          %1436 = vmatprep.subr.mxu0 0.0
          %1437 = vmatpush1.msra.mxu0 %v1233
          %1438 = vmatprep.subr.mxu0 0.0
          %1439 = vmatpush1.msra.mxu0 %v1234
          %1440 = vmatprep.subr.mxu0 0.0
          %1441 = vmatpush1.msra.mxu0 %v1235
          %1442 = vmatprep.subr.mxu0 0.0
          %1443 = vmatpush1.msra.mxu0 %v1236
          %1444 = vmatprep.subr.mxu0 0.0
          %1445 = vmatpush1.msra.mxu0 %v1237
          %1446 = vmatprep.subr.mxu0 0.0
          %1447 = vmatpush1.msra.mxu0 %v1238
          %1448 = vmatprep.subr.mxu0 0.0
          %1449 = vmatpush1.msra.mxu0 %v1239
          %1450 = vmatprep.subr.mxu0 0.0
          %1451 = vmatpush1.msra.mxu0 %v1240
          %1452 = vmatprep.subr.mxu0 0.0
          %1453 = vmatpush1.msra.mxu0 %v1241
          %1454 = vmatprep.subr.mxu0 0.0
          %1455 = vmatpush1.msra.mxu0 %v1242
          %1456 = vmatprep.subr.mxu0 0.0
          %1457 = vmatpush1.msra.mxu0 %v1243
          %1458 = vmatprep.subr.mxu0 0.0
          %1459 = vmatpush1.msra.mxu0 0.0
          %1460 = vmatprep.subr.mxu0 0.0
          %1461 = vmatpush1.msra.mxu0 0.0
          %1462 = vmatprep.subr.mxu0 0.0
          %1463 = vmatpush1.msra.mxu0 0.0
          %1464 = vmatprep.subr.mxu0 0.0
          %1465 = vmatpush1.msra.mxu0 0.0
          %1466 = vmatprep.subr.mxu0 0.0
          %1467 = vmatpush1.msra.mxu0 0.0
          %1468 = vmatprep.subr.mxu0 0.0
          %1469 = vmatpush1.msra.mxu0 0.0
          %1470 = vmatprep.subr.mxu0 0.0
          %1471 = vmatpush1.msra.mxu0 0.0
          %1472 = vmatprep.subr.mxu0 0.0
          %1473 = vmatpush1.msra.mxu0 0.0
          %1474 = vmatprep.subr.mxu0 0.0
          %1475 = vmatpush1.msra.mxu0 0.0
          %1476 = vmatprep.subr.mxu0 0.0
          %1477 = vmatpush1.msra.mxu0 0.0
          %1478 = vmatprep.subr.mxu0 0.0
          %1479 = vmatpush1.msra.mxu0 0.0
          %1480 = vmatprep.subr.mxu0 0.0
          %1481 = vmatpush1.msra.mxu0 0.0
          %1482 = vmatprep.subr.mxu0 0.0
          %1483 = vmatpush1.msra.mxu0 0.0
          %1484 = vmatprep.subr.mxu0 0.0
          %1485 = vmatpush1.msra.mxu0 0.0
          %1486 = vmatprep.subr.mxu0 0.0
          %1487 = vmatpush1.msra.mxu0 0.0
          %1488 = vmatprep.subr.mxu0 0.0
          %1489 = vmatpush1.msra.mxu0 0.0
          %1490 = vmatprep.mubr.f32.mxu0 0.0
          %1491 = vmatmul.mubr.f32.gmra.mrb[0].mxu0 %v1263
          %v1492 = vpop.f32.mrb[0].mxu0
          %v1493 = vadd.f32 0.0, %v1492
          %v1494 = vpop.f32.mrb[0].mxu0
          %1495 = vdwg.mxu0
          %v1496 = vld [vmem:[#allocation4] sm:$0x3]
          %s1497 = sadd.s32 %s35, 1
          %s1498 = smul.u32 %s1497, 128
          %s1499 = scalar_lea.vmem [#allocation14], %s1498
          %v1500 = vld [vmem:[%s1499] sm:$0xff]
          %v1501 = vld [vmem:[%s1499 + $0x8] sm:$0xff]
          %v1502 = vld [vmem:[%s1499 + $0x10] sm:$0xff]
          %v1503 = vld [vmem:[%s1499 + $0x18] sm:$0xff]
          %v1504 = vld [vmem:[%s1499 + $0x20] sm:$0xff]
          %v1505 = vld [vmem:[%s1499 + $0x28] sm:$0xff]
          %v1506 = vld [vmem:[%s1499 + $0x30] sm:$0xff]
          %v1507 = vld [vmem:[%s1499 + $0x38] sm:$0xff]
          %v1508 = vld [vmem:[%s1499 + $0x40] sm:$0xff]
          %v1509 = vld [vmem:[%s1499 + $0x48] sm:$0xff]
          %v1510 = vld [vmem:[%s1499 + $0x50] sm:$0xff]
          %v1511 = vld [vmem:[%s1499 + $0x58] sm:$0xff]
          %v1512 = vld [vmem:[%s1499 + $0x60] sm:$0xff]
          %v1513 = vld [vmem:[%s1499 + $0x68] sm:$0xff]
          %v1514 = vld [vmem:[%s1499 + $0x70] sm:$0xff]
          %v1515 = vld [vmem:[%s1499 + $0x78] sm:$0xff]
          %1516 = vmatprep.subr.mxu0 0.0
          %1517 = vmatpush1.msra.mxu0 %v1500
          %1518 = vmatprep.subr.mxu0 0.0
          %1519 = vmatpush1.msra.mxu0 %v1501
          %1520 = vmatprep.subr.mxu0 0.0
          %1521 = vmatpush1.msra.mxu0 %v1502
          %1522 = vmatprep.subr.mxu0 0.0
          %1523 = vmatpush1.msra.mxu0 %v1503
          %1524 = vmatprep.subr.mxu0 0.0
          %1525 = vmatpush1.msra.mxu0 %v1504
          %1526 = vmatprep.subr.mxu0 0.0
          %1527 = vmatpush1.msra.mxu0 %v1505
          %1528 = vmatprep.subr.mxu0 0.0
          %1529 = vmatpush1.msra.mxu0 %v1506
          %1530 = vmatprep.subr.mxu0 0.0
          %1531 = vmatpush1.msra.mxu0 %v1507
          %1532 = vmatprep.subr.mxu0 0.0
          %1533 = vmatpush1.msra.mxu0 %v1508
          %1534 = vmatprep.subr.mxu0 0.0
          %1535 = vmatpush1.msra.mxu0 %v1509
          %1536 = vmatprep.subr.mxu0 0.0
          %1537 = vmatpush1.msra.mxu0 %v1510
          %1538 = vmatprep.subr.mxu0 0.0
          %1539 = vmatpush1.msra.mxu0 %v1511
          %1540 = vmatprep.subr.mxu0 0.0
          %1541 = vmatpush1.msra.mxu0 %v1512
          %1542 = vmatprep.subr.mxu0 0.0
          %1543 = vmatpush1.msra.mxu0 %v1513
          %1544 = vmatprep.subr.mxu0 0.0
          %1545 = vmatpush1.msra.mxu0 %v1514
          %1546 = vmatprep.subr.mxu0 0.0
          %1547 = vmatpush1.msra.mxu0 %v1515
          %1548 = vmatprep.subr.mxu0 0.0
          %1549 = vmatpush1.msra.mxu0 0.0
          %1550 = vmatprep.subr.mxu0 0.0
          %1551 = vmatpush1.msra.mxu0 0.0
          %1552 = vmatprep.subr.mxu0 0.0
          %1553 = vmatpush1.msra.mxu0 0.0
          %1554 = vmatprep.subr.mxu0 0.0
          %1555 = vmatpush1.msra.mxu0 0.0
          %1556 = vmatprep.subr.mxu0 0.0
          %1557 = vmatpush1.msra.mxu0 0.0
          %1558 = vmatprep.subr.mxu0 0.0
          %1559 = vmatpush1.msra.mxu0 0.0
          %1560 = vmatprep.subr.mxu0 0.0
          %1561 = vmatpush1.msra.mxu0 0.0
          %1562 = vmatprep.subr.mxu0 0.0
          %1563 = vmatpush1.msra.mxu0 0.0
          %1564 = vmatprep.subr.mxu0 0.0
          %1565 = vmatpush1.msra.mxu0 0.0
          %1566 = vmatprep.subr.mxu0 0.0
          %1567 = vmatpush1.msra.mxu0 0.0
          %1568 = vmatprep.subr.mxu0 0.0
          %1569 = vmatpush1.msra.mxu0 0.0
          %1570 = vmatprep.subr.mxu0 0.0
          %1571 = vmatpush1.msra.mxu0 0.0
          %1572 = vmatprep.subr.mxu0 0.0
          %1573 = vmatpush1.msra.mxu0 0.0
          %1574 = vmatprep.subr.mxu0 0.0
          %1575 = vmatpush1.msra.mxu0 0.0
          %1576 = vmatprep.subr.mxu0 0.0
          %1577 = vmatpush1.msra.mxu0 0.0
          %1578 = vmatprep.subr.mxu0 0.0
          %1579 = vmatpush1.msra.mxu0 0.0
          %1580 = vmatprep.mubr.f32.mxu0 0.0
          %1581 = vmatmul.mubr.f32.gmra.mrb[0].mxu0 %v1493
          %v1582 = vpop.f32.mrb[0].mxu0
          %v1583 = vadd.f32 0.0, %v1582
          %v1584 = vpop.f32.mrb[0].mxu0
          %1585 = vdwg.mxu0
          %v1586 = vadd.f32 %v1496, %v1583
          %1587 = vst [vmem:[#allocation4] sm:$0x3] %v1586
        $region100: #{tpu_custom_call.1} parent=59 // pred_fallthru
          _
        %p1588 = scmp.eq.s32.totalorder %s35, 1
        %p1589 = scmp.eq.s32.totalorder %s36, 1
        %p1590 = pnand %p1588, %p1589
        %p1591 = pneg %p1590
        %p1592 = pnand %p1591, %p793
        %p1593 = pneg %p1592
        // Predicated region
        $region105: #{tpu_custom_call.1} parent=59 // pred_check
          _
        $region106: #{tpu_custom_call.1} parent=59 // pred_check_branch
          %1595 = sbr.rel (%p1592) target = $region108
        $region107: #{tpu_custom_call.1} parent=59 // pred_region
          %v1596 = vld [vmem:[#allocation4] sm:$0x3]
          %v1597 = vld [vmem:[%s9] sm:$0x1]
          %v1599 = vlaneseq
          %v1600 = vshrl.u32 %v1599, 7
          %v1601 = vsub.s32 0, %v1600
          %v1602 = vrot.slane %v1597, %v1601
          %v1604 = vadd.f32 %v1596, %v1602
          %1605 = vst [vmem:[#allocation16] sm:$0x3] %v1604
        $region108: #{tpu_custom_call.1} parent=59 // pred_fallthru
          _
        // Predicated region
        $region109: #{tpu_custom_call.1} parent=59 // pred_check
          %p1606 = pneg %p284
        $region110: #{tpu_custom_call.1} parent=59 // pred_check_branch
          %1608 = sbr.rel (%p1606) target = $region112
        $region111: #{tpu_custom_call.1} parent=59 // pred_region
          %s1610 = ssub.s32 32, 32
          %1611 = vsyncadd [#allocation7], %s1610
          %s1613 = sshll.u32 [#allocation16], 4
          %s1614 = int_to_ptr.vmem [resolvable:$true] %s1613
          %1616 = dma.vmem_to_hbm [thread:$0]  %s1614, 32, %s10, [#allocation7]
        $region112: #{tpu_custom_call.1} parent=59 // pred_fallthru
          _
        // Predicated region
        $region113: #{tpu_custom_call.1} parent=59 // pred_check
          %p1617 = pneg %p284
        $region114: #{tpu_custom_call.1} parent=59 // pred_check_branch
          %1619 = sbr.rel (%p1617) target = $region116
        $region115: #{tpu_custom_call.1} parent=59 // pred_region
          %1620 = dma.done [#allocation7], 32
        $region116: #{tpu_custom_call.1} parent=59 // pred_fallthru
          _
      $region60: #{tpu_custom_call.1} parent=5 // pred_fallthru
        _
      %p1621 = scmp.le.s32.totalorder 2, %s25
      // Predicated region
      $region117: #{tpu_custom_call.1} parent=5 // pred_check
        %p1622 = pneg %p1621
      $region118: #{tpu_custom_call.1} parent=5 // pred_check_branch
        %1624 = sbr.rel (%p1622) target = $region120
      $region119: #{tpu_custom_call.1} parent=5 // pred_region
        %s1625 = ssub.s32 %s25, 2
      $region120: #{tpu_custom_call.1} parent=5 // pred_fallthru
        _
    $region6: #{tpu_custom_call.1} parent=1 // loop_footer
      %s29 = sadd.s32 1, %s25
    $region7: #{tpu_custom_call.1} parent=1 // loop_footer_branch
      %24 = sbr.rel target = $region3
    $region8: #{tpu_custom_call.1} parent=1 // loop_exit
      _
    %1626 = vsyncpa [#allocation6], 1
    %s1627 = scalar_lea.sflag [#allocation6], 1
    %1628 = vsyncpa %s1627, 1
    %1629 = vsyncpa [#allocation9], 1
    %s1630 = scalar_lea.sflag [#allocation9], 1
    %1631 = vsyncpa %s1630, 1
    %1632 = vsyncpa [#allocation12], 1
    %1633 = vsyncpa [#allocation15], 1
    %1634 = vsyncpa [#allocation7], 1
    %s1635 = scalar_lea.sflag [#allocation7], 1
    %1636 = vsyncpa %s1635, 1

</llo_original>
